<compile_context>
chip_gen: v7x
topology: tpu7x:2x2x1
jax: 0.10.0
libtpu: 0.0.40
codegen_flags: <defaults>
</compile_context>

<pallas_src>
import functools
import math

import jax
import jax.numpy as jnp
from jax import lax
from jax.experimental import pallas as pl
from jax.experimental.pallas import tpu as pltpu

K_TOPK = 10                                # k of the TopK activation in the reference model
_NEG = float(jnp.finfo(jnp.float32).min)   # finite "removed" sentinel; only collides with a
                                           # legitimate pre == -FLT_MAX (practically unreachable)
_ROWS_PER_CHUNK = 8                        # top-k selection sub-chunk (one sublane group)


def _split_bf16(a):
    """Split an f32 array into (hi, lo) bf16 parts with a ~= hi + lo."""
    a = a.astype(jnp.float32)
    hi = a.astype(jnp.bfloat16)
    lo = (a - hi.astype(jnp.float32)).astype(jnp.bfloat16)
    return hi, lo


def _bf16x3_matmul(a_f32, b_hi, b_lo):
    """f32-accurate matmul via 3 bf16 MXU passes (hi*hi + lo*hi + hi*lo).

    ~2x fewer MXU passes than Precision.HIGHEST f32 emulation; error ~1e-5
    relative.  Used both inside the Pallas kernel and by the pure-JAX
    reference in __main__ so top-k tie-breaks see identical pre-activations.
    """
    a_hi, a_lo = _split_bf16(a_f32)
    out = jnp.dot(a_hi, b_hi, preferred_element_type=jnp.float32)
    out = out + jnp.dot(a_lo, b_hi, preferred_element_type=jnp.float32)
    out = out + jnp.dot(a_hi, b_lo, preferred_element_type=jnp.float32)
    return out


def _sae_fwd_kernel(x_ref, we_hi_ref, we_lo_ref, b_enc_ref,
                    wd_hi_ref, wd_lo_ref, b_dec_ref,
                    enc_ref, rec_ref, *, k, rows_per_chunk):
    # ---- Encoder: (TN, D) @ (D, H) + (1, H), 3-pass bf16 on the MXU ----
    pre = _bf16x3_matmul(x_ref[...], we_hi_ref[...], we_lo_ref[...]) + b_enc_ref[...]

    # Stage the dense pre-activation in the VMEM-resident output tile; the
    # selection loop below rewrites it chunk-by-chunk with top-k-masked values.
    enc_ref[...] = pre

    tn, h = pre.shape
    r = rows_per_chunk
    col = lax.broadcasted_iota(jnp.int32, (r, h), dimension=1)   # hoisted out of the loops

    # ---- TopK(k) along the dict axis: exact-K, first-occurrence tie-break ----
    # Row-chunked so work / cand / keep are (r, h) and stay vreg-resident
    # instead of spilling (tn, h)-wide temporaries on every k iteration.
    # NOTE: a NaN row makes `work == m` all-false, so fewer than k entries get
    # kept for that row (torch.topk would propagate the NaN) -- edge case only.
    # TODO(synk): fold the max + first-occurrence-argmin pair into a single
    # argmax reduction if/when Mosaic lowers variadic reduces cleanly.
    def select_chunk(c, carry):
        row0 = pl.multiple_of(c * r, r)
        sub = enc_ref[pl.ds(row0, r), :]                  # pre values for this chunk
        work = sub
        keep_mask = None
        for _ in range(k):                                # k small & static -> unrolled
            m = jnp.max(work, axis=-1, keepdims=True)     # row max (XLU)
            cand = jnp.where(work == m, col, h)
            sel = jnp.min(cand, axis=-1, keepdims=True)   # first occurrence (XLU)
            keep = col == sel                             # one-hot per row
            keep_mask = keep if keep_mask is None else jnp.logical_or(keep_mask, keep)
            work = jnp.where(keep, _NEG, work)            # remove from pool
        enc_ref[pl.ds(row0, r), :] = jnp.where(keep_mask, sub, 0.0)
        return carry

    lax.fori_loop(0, tn // r, select_chunk, 0)

    # ---- Decoder: (TN, H) @ (H, D) + (1, D), 3-pass bf16 on the MXU ----
    rec = _bf16x3_matmul(enc_ref[...], wd_hi_ref[...], wd_lo_ref[...]) + b_dec_ref[...]
    rec_ref[...] = rec.astype(rec_ref.dtype)


def _vmem_capacity_bytes():
    try:
        return int(pltpu.get_tpu_info().vmem_capacity_bytes)
    except Exception:        # unknown chip / no device info: assume v7x's 64 MiB
        return 64 << 20


def _vmem_estimate_bytes(tn, d, h):
    """Rough upper bound on the kernel's VMEM footprint for one grid step."""
    f32, bf16 = 4, 2
    row_tiles = 2 * f32 * tn * (d + h + d)                       # x / enc / rec tiles, double-buffered
    weights = 2 * (2 * bf16 * (d * h + h * d) + f32 * (d + h))   # hi+lo mats + biases, double-buffered
    temps = f32 * tn * (2 * h + d) + 2 * bf16 * tn * (d + h)     # pre copy + bf16 splits + chunk temps
    return int(1.3 * (row_tiles + weights + temps)) + (2 << 20)


def _round_up(x, m):
    return (x + m - 1) // m * m


def sae_forward(x, w_enc, b_enc, w_dec, b_dec, *, k=K_TOPK, tile_n=None):
    """Fused SparseAutoEncoder forward -> (encoded, reconstruction).

    x:     (..., activation_dim) float32
    w_enc: (activation_dim, dict_size)   (= torch encoder.weight.T)
    b_enc: (dict_size,)
    w_dec: (dict_size, activation_dim)   (= torch decoder.weight.T)
    b_dec: (activation_dim,)
    """
    d = x.shape[-1]
    h = w_enc.shape[-1]
    assert w_enc.shape == (d, h) and w_dec.shape == (h, d)
    assert b_enc.shape == (h,) and b_dec.shape == (d,)
    assert h >= k, "dict_size must be >= k"

    lead = x.shape[:-1]
    x2 = x.reshape(-1, d).astype(jnp.float32)
    n = x2.shape[0]
    r = _ROWS_PER_CHUNK

    vmem_cap = _vmem_capacity_bytes()
    headroom = int(0.85 * vmem_cap)          # ~54 MiB on v7x, ~109 MiB on v5e/v6e
    if tile_n is None:
        tile_n = 512 if vmem_cap >= (96 << 20) else 256

    # Row tile: a multiple of the selection chunk, small enough that the grid
    # has >= 2 steps whenever possible (v7x megacore shards the "parallel"
    # axis), shrunk further if the VMEM estimate does not fit.
    tn = max(r, min(_round_up(tile_n, r), _round_up(pl.cdiv(n, 2), r)))
    while tn > r and _vmem_estimate_bytes(tn, d, h) > headroom:
        tn = max(r, (tn // 2) // r * r)

    n_pad = _round_up(n, tn)
    grid = (n_pad // tn,)
    if n_pad != n:
        x2 = jnp.concatenate([x2, jnp.zeros((n_pad - n, d), jnp.float32)], axis=0)

    we_hi, we_lo = _split_bf16(w_enc)
    wd_hi, wd_lo = _split_bf16(w_dec)

    def const_spec(shape):
        return pl.BlockSpec(shape, lambda i: (0,) * len(shape))

    kernel = functools.partial(_sae_fwd_kernel, k=k, rows_per_chunk=r)
    enc, rec = pl.pallas_call(
        kernel,
        out_shape=(jax.ShapeDtypeStruct((n_pad, h), jnp.float32),
                   jax.ShapeDtypeStruct((n_pad, d), jnp.float32)),
        grid_spec=pltpu.PrefetchScalarGridSpec(
            num_scalar_prefetch=0,
            grid=grid,
            in_specs=[
                pl.BlockSpec((tn, d), lambda i: (i, 0)),   # x row tile
                const_spec((d, h)),                        # encoder weight hi (resident)
                const_spec((d, h)),                        # encoder weight lo (resident)
                const_spec((1, h)),                        # encoder bias
                const_spec((h, d)),                        # decoder weight hi (resident)
                const_spec((h, d)),                        # decoder weight lo (resident)
                const_spec((1, d)),                        # decoder bias
            ],
            out_specs=(
                pl.BlockSpec((tn, h), lambda i: (i, 0)),   # encoded
                pl.BlockSpec((tn, d), lambda i: (i, 0)),   # reconstruction
            ),
        ),
        compiler_params=pltpu.CompilerParams(
            dimension_semantics=("parallel",),
            vmem_limit_bytes=max(16 << 20, min(_vmem_estimate_bytes(tn, d, h), headroom)),
        ),
    )(x2, we_hi, we_lo, b_enc.reshape(1, h).astype(jnp.float32),
      wd_hi, wd_lo, b_dec.reshape(1, d).astype(jnp.float32))

    return enc[:n].reshape(*lead, h), rec[:n].reshape(*lead, d)


if __name__ == "__main__":
    key = jax.random.PRNGKey(0)
    kx, kwe, kbe, kwd, kbd = jax.random.split(key, 5)

    B, S = 2, 8          # batch, tokens per image
    D, H = 128, 512      # activation_dim, dict_size (lane-aligned)
    K = K_TOPK

    x = jax.random.normal(kx, (B, S, D), dtype=jnp.float32)
    w_enc = jax.random.normal(kwe, (D, H), dtype=jnp.float32) / math.sqrt(D)
    b_enc = jax.random.normal(kbe, (H,), dtype=jnp.float32) * 0.05
    w_dec = jax.random.normal(kwd, (H, D), dtype=jnp.float32) / math.sqrt(H)
    b_dec = jax.random.normal(kbd, (D,), dtype=jnp.float32) * 0.05

    enc, rec = sae_forward(x, w_enc, b_enc, w_dec, b_dec, k=K)
    enc, rec = jax.block_until_ready((enc, rec))

    # Pure-JAX reference (torch semantics: exact top-K scatter along the dict
    # dim).  The matmuls reuse the same 3-pass bf16 decomposition as the kernel
    # so tie-breaks are decided on numerically identical pre-activations; the
    # decomposition itself is checked against a full-f32 matmul below.
    x2 = x.reshape(-1, D)
    we_hi, we_lo = _split_bf16(w_enc)
    wd_hi, wd_lo = _split_bf16(w_dec)
    pre = _bf16x3_matmul(x2, we_hi, we_lo) + b_enc
    pre_f32 = jnp.dot(x2, w_enc, precision=lax.Precision.HIGHEST) + b_enc
    assert jnp.allclose(pre, pre_f32, atol=1e-3, rtol=1e-3), "bf16x3 encoder drift"
    vals, idx = lax.top_k(pre, K)
    rows = jnp.arange(pre.shape[0])[:, None]
    enc_ref = jnp.zeros_like(pre).at[rows, idx].set(vals)
    rec_ref = _bf16x3_matmul(enc_ref, wd_hi, wd_lo) + b_dec
    enc_ref = enc_ref.reshape(B, S, H)
    rec_ref = rec_ref.reshape(B, S, D)

    assert enc.shape == (B, S, H) and rec.shape == (B, S, D)
    assert enc.dtype == jnp.float32 and rec.dtype == jnp.float32
    assert jnp.allclose(enc, enc_ref, atol=1e-3, rtol=1e-3), "encoded mismatch"
    assert jnp.allclose(rec, rec_ref, atol=1e-3, rtol=1e-3), "reconstruction mismatch"
    nnz = jnp.sum(enc != 0.0, axis=-1)
    assert int(jnp.min(nnz)) == K and int(jnp.max(nnz)) == K

    print("KERNEL_OK")
</pallas_src>

<mosaic_0001>
module attributes {stable_mosaic.version = 11 : i64} {
  func.func @_sae_fwd_kernel(%arg0: i32, %arg1: memref<8x128xf32, #tpu.memory_space<vmem>>, %arg2: memref<128x512xbf16, #tpu.memory_space<vmem>>, %arg3: memref<128x512xbf16, #tpu.memory_space<vmem>>, %arg4: memref<1x512xf32, #tpu.memory_space<vmem>>, %arg5: memref<512x128xbf16, #tpu.memory_space<vmem>>, %arg6: memref<512x128xbf16, #tpu.memory_space<vmem>>, %arg7: memref<1x128xf32, #tpu.memory_space<vmem>>, %arg8: memref<8x512xf32, #tpu.memory_space<vmem>>, %arg9: memref<8x128xf32, #tpu.memory_space<vmem>>) attributes {dimension_semantics = [#tpu.dimension_semantics<parallel>], iteration_bounds = array<i64: 2>, scalar_prefetch = 0 : i64, scratch_operands = 0 : i64, tpu.core_type = #tpu.core_type<tc>, window_params = [{transform_indices = @transform_0, window_bounds = array<i64: 8, 128>}, {pipeline_mode = #tpu.pipeline_mode<synchronous>, transform_indices = @transform_1, window_bounds = array<i64: 128, 512>}, {pipeline_mode = #tpu.pipeline_mode<synchronous>, transform_indices = @transform_2, window_bounds = array<i64: 128, 512>}, {pipeline_mode = #tpu.pipeline_mode<synchronous>, transform_indices = @transform_3, window_bounds = array<i64: 1, 512>}, {pipeline_mode = #tpu.pipeline_mode<synchronous>, transform_indices = @transform_4, window_bounds = array<i64: 512, 128>}, {pipeline_mode = #tpu.pipeline_mode<synchronous>, transform_indices = @transform_5, window_bounds = array<i64: 512, 128>}, {pipeline_mode = #tpu.pipeline_mode<synchronous>, transform_indices = @transform_6, window_bounds = array<i64: 1, 128>}, {transform_indices = @transform_7, window_bounds = array<i64: 8, 512>}, {transform_indices = @transform_8, window_bounds = array<i64: 8, 128>}]} {
    %c0 = arith.constant 0 : index
    %c0_0 = arith.constant 0 : index
    %0 = vector.load %arg1[%c0, %c0_0] : memref<8x128xf32, #tpu.memory_space<vmem>>, vector<8x128xf32>
    %c0_1 = arith.constant 0 : index
    %c0_2 = arith.constant 0 : index
    %1 = vector.load %arg2[%c0_1, %c0_2] : memref<128x512xbf16, #tpu.memory_space<vmem>>, vector<128x512xbf16>
    %c0_3 = arith.constant 0 : index
    %c0_4 = arith.constant 0 : index
    %2 = vector.load %arg3[%c0_3, %c0_4] : memref<128x512xbf16, #tpu.memory_space<vmem>>, vector<128x512xbf16>
    %3 = arith.truncf %0 : vector<8x128xf32> to vector<8x128xbf16>
    %4 = arith.extf %3 : vector<8x128xbf16> to vector<8x128xf32>
    %5 = arith.subf %0, %4 : vector<8x128xf32>
    %6 = arith.truncf %5 : vector<8x128xf32> to vector<8x128xbf16>
    %cst = arith.constant dense<0.000000e+00> : vector<8x512xf32>
    %7 = tpu.matmul %3, %1, %cst {dimension_numbers = #tpu.dot_dimension_numbers<[1], [0], [0], [1], [0, 0, 1, 1], [], []>} : vector<8x128xbf16>, vector<128x512xbf16>, vector<8x512xf32> -> vector<8x512xf32>
    %cst_5 = arith.constant dense<0.000000e+00> : vector<8x512xf32>
    %8 = tpu.matmul %6, %1, %cst_5 {dimension_numbers = #tpu.dot_dimension_numbers<[1], [0], [0], [1], [0, 0, 1, 1], [], []>} : vector<8x128xbf16>, vector<128x512xbf16>, vector<8x512xf32> -> vector<8x512xf32>
    %9 = arith.addf %7, %8 : vector<8x512xf32>
    %cst_6 = arith.constant dense<0.000000e+00> : vector<8x512xf32>
    %10 = tpu.matmul %3, %2, %cst_6 {dimension_numbers = #tpu.dot_dimension_numbers<[1], [0], [0], [1], [0, 0, 1, 1], [], []>} : vector<8x128xbf16>, vector<128x512xbf16>, vector<8x512xf32> -> vector<8x512xf32>
    %11 = arith.addf %9, %10 : vector<8x512xf32>
    %c0_7 = arith.constant 0 : index
    %c0_8 = arith.constant 0 : index
    %12 = vector.load %arg4[%c0_7, %c0_8] : memref<1x512xf32, #tpu.memory_space<vmem>>, vector<1x512xf32>
    %13 = vector.broadcast %12 : vector<1x512xf32> to vector<8x512xf32>
    %14 = arith.addf %11, %13 : vector<8x512xf32>
    %c0_9 = arith.constant 0 : index
    %c0_10 = arith.constant 0 : index
    %15 = vector.load %arg8[%c0_9, %c0_10] : memref<8x512xf32, #tpu.memory_space<vmem>>, vector<8x512xf32>
    tpu.vector_store %arg8[%c0_9, %c0_10], %14 {strides = array<i32>} : memref<8x512xf32, #tpu.memory_space<vmem>>, vector<8x512xf32>,
    %16 = tpu.iota {dimensions = array<i32: 1>} : vector<8x512xi32>
    %c0_i32 = arith.constant 0 : i32
    %c8_i32 = arith.constant 8 : i32
    %17 = arith.muli %c0_i32, %c8_i32 : i32
    %18 = tpu.assume_multiple %17, 8 : i32
    %19 = arith.index_cast %18 : i32 to index
    %c0_11 = arith.constant 0 : index
    %20 = vector.load %arg8[%19, %c0_11] : memref<8x512xf32, #tpu.memory_space<vmem>>, vector<8x512xf32>
    %cst_12 = arith.constant dense<0xFF800000> : vector<8xf32>
    %21 = vector.multi_reduction <maximumf>, %20, %cst_12 [1] : vector<8x512xf32> to vector<8xf32>
    %22 = vector.shape_cast %21 : vector<8xf32> to vector<8x1xf32>
    %23 = vector.broadcast %22 : vector<8x1xf32> to vector<8x512xf32>
    %24 = arith.cmpf oeq, %20, %23 : vector<8x512xf32>
    %c512_i32 = arith.constant 512 : i32
    %25 = vector.broadcast %c512_i32 : i32 to vector<8x512xi32>
    %26 = arith.select %24, %16, %25 : vector<8x512xi1>, vector<8x512xi32>
    %cst_13 = arith.constant dense<2147483647> : vector<8xi32>
    %27 = vector.multi_reduction <minsi>, %26, %cst_13 [1] : vector<8x512xi32> to vector<8xi32>
    %28 = vector.shape_cast %27 : vector<8xi32> to vector<8x1xi32>
    %29 = vector.broadcast %28 : vector<8x1xi32> to vector<8x512xi32>
    %30 = arith.cmpi eq, %16, %29 : vector<8x512xi32>
    %cst_14 = arith.constant -3.40282347E+38 : f32
    %31 = vector.broadcast %cst_14 : f32 to vector<8x512xf32>
    %32 = arith.select %30, %31, %20 : vector<8x512xi1>, vector<8x512xf32>
    %cst_15 = arith.constant dense<0xFF800000> : vector<8xf32>
    %33 = vector.multi_reduction <maximumf>, %32, %cst_15 [1] : vector<8x512xf32> to vector<8xf32>
    %34 = vector.shape_cast %33 : vector<8xf32> to vector<8x1xf32>
    %35 = vector.broadcast %34 : vector<8x1xf32> to vector<8x512xf32>
    %36 = arith.cmpf oeq, %32, %35 : vector<8x512xf32>
    %c512_i32_16 = arith.constant 512 : i32
    %37 = vector.broadcast %c512_i32_16 : i32 to vector<8x512xi32>
    %38 = arith.select %36, %16, %37 : vector<8x512xi1>, vector<8x512xi32>
    %cst_17 = arith.constant dense<2147483647> : vector<8xi32>
    %39 = vector.multi_reduction <minsi>, %38, %cst_17 [1] : vector<8x512xi32> to vector<8xi32>
    %40 = vector.shape_cast %39 : vector<8xi32> to vector<8x1xi32>
    %41 = vector.broadcast %40 : vector<8x1xi32> to vector<8x512xi32>
    %42 = arith.cmpi eq, %16, %41 : vector<8x512xi32>
    %43 = arith.ori %30, %42 : vector<8x512xi1>
    %cst_18 = arith.constant -3.40282347E+38 : f32
    %44 = vector.broadcast %cst_18 : f32 to vector<8x512xf32>
    %45 = arith.select %42, %44, %32 : vector<8x512xi1>, vector<8x512xf32>
    %cst_19 = arith.constant dense<0xFF800000> : vector<8xf32>
    %46 = vector.multi_reduction <maximumf>, %45, %cst_19 [1] : vector<8x512xf32> to vector<8xf32>
    %47 = vector.shape_cast %46 : vector<8xf32> to vector<8x1xf32>
    %48 = vector.broadcast %47 : vector<8x1xf32> to vector<8x512xf32>
    %49 = arith.cmpf oeq, %45, %48 : vector<8x512xf32>
    %c512_i32_20 = arith.constant 512 : i32
    %50 = vector.broadcast %c512_i32_20 : i32 to vector<8x512xi32>
    %51 = arith.select %49, %16, %50 : vector<8x512xi1>, vector<8x512xi32>
    %cst_21 = arith.constant dense<2147483647> : vector<8xi32>
    %52 = vector.multi_reduction <minsi>, %51, %cst_21 [1] : vector<8x512xi32> to vector<8xi32>
    %53 = vector.shape_cast %52 : vector<8xi32> to vector<8x1xi32>
    %54 = vector.broadcast %53 : vector<8x1xi32> to vector<8x512xi32>
    %55 = arith.cmpi eq, %16, %54 : vector<8x512xi32>
    %56 = arith.ori %43, %55 : vector<8x512xi1>
    %cst_22 = arith.constant -3.40282347E+38 : f32
    %57 = vector.broadcast %cst_22 : f32 to vector<8x512xf32>
    %58 = arith.select %55, %57, %45 : vector<8x512xi1>, vector<8x512xf32>
    %cst_23 = arith.constant dense<0xFF800000> : vector<8xf32>
    %59 = vector.multi_reduction <maximumf>, %58, %cst_23 [1] : vector<8x512xf32> to vector<8xf32>
    %60 = vector.shape_cast %59 : vector<8xf32> to vector<8x1xf32>
    %61 = vector.broadcast %60 : vector<8x1xf32> to vector<8x512xf32>
    %62 = arith.cmpf oeq, %58, %61 : vector<8x512xf32>
    %c512_i32_24 = arith.constant 512 : i32
    %63 = vector.broadcast %c512_i32_24 : i32 to vector<8x512xi32>
    %64 = arith.select %62, %16, %63 : vector<8x512xi1>, vector<8x512xi32>
    %cst_25 = arith.constant dense<2147483647> : vector<8xi32>
    %65 = vector.multi_reduction <minsi>, %64, %cst_25 [1] : vector<8x512xi32> to vector<8xi32>
    %66 = vector.shape_cast %65 : vector<8xi32> to vector<8x1xi32>
    %67 = vector.broadcast %66 : vector<8x1xi32> to vector<8x512xi32>
    %68 = arith.cmpi eq, %16, %67 : vector<8x512xi32>
    %69 = arith.ori %56, %68 : vector<8x512xi1>
    %cst_26 = arith.constant -3.40282347E+38 : f32
    %70 = vector.broadcast %cst_26 : f32 to vector<8x512xf32>
    %71 = arith.select %68, %70, %58 : vector<8x512xi1>, vector<8x512xf32>
    %cst_27 = arith.constant dense<0xFF800000> : vector<8xf32>
    %72 = vector.multi_reduction <maximumf>, %71, %cst_27 [1] : vector<8x512xf32> to vector<8xf32>
    %73 = vector.shape_cast %72 : vector<8xf32> to vector<8x1xf32>
    %74 = vector.broadcast %73 : vector<8x1xf32> to vector<8x512xf32>
    %75 = arith.cmpf oeq, %71, %74 : vector<8x512xf32>
    %c512_i32_28 = arith.constant 512 : i32
    %76 = vector.broadcast %c512_i32_28 : i32 to vector<8x512xi32>
    %77 = arith.select %75, %16, %76 : vector<8x512xi1>, vector<8x512xi32>
    %cst_29 = arith.constant dense<2147483647> : vector<8xi32>
    %78 = vector.multi_reduction <minsi>, %77, %cst_29 [1] : vector<8x512xi32> to vector<8xi32>
    %79 = vector.shape_cast %78 : vector<8xi32> to vector<8x1xi32>
    %80 = vector.broadcast %79 : vector<8x1xi32> to vector<8x512xi32>
    %81 = arith.cmpi eq, %16, %80 : vector<8x512xi32>
    %82 = arith.ori %69, %81 : vector<8x512xi1>
    %cst_30 = arith.constant -3.40282347E+38 : f32
    %83 = vector.broadcast %cst_30 : f32 to vector<8x512xf32>
    %84 = arith.select %81, %83, %71 : vector<8x512xi1>, vector<8x512xf32>
    %cst_31 = arith.constant dense<0xFF800000> : vector<8xf32>
    %85 = vector.multi_reduction <maximumf>, %84, %cst_31 [1] : vector<8x512xf32> to vector<8xf32>
    %86 = vector.shape_cast %85 : vector<8xf32> to vector<8x1xf32>
    %87 = vector.broadcast %86 : vector<8x1xf32> to vector<8x512xf32>
    %88 = arith.cmpf oeq, %84, %87 : vector<8x512xf32>
    %c512_i32_32 = arith.constant 512 : i32
    %89 = vector.broadcast %c512_i32_32 : i32 to vector<8x512xi32>
    %90 = arith.select %88, %16, %89 : vector<8x512xi1>, vector<8x512xi32>
    %cst_33 = arith.constant dense<2147483647> : vector<8xi32>
    %91 = vector.multi_reduction <minsi>, %90, %cst_33 [1] : vector<8x512xi32> to vector<8xi32>
    %92 = vector.shape_cast %91 : vector<8xi32> to vector<8x1xi32>
    %93 = vector.broadcast %92 : vector<8x1xi32> to vector<8x512xi32>
    %94 = arith.cmpi eq, %16, %93 : vector<8x512xi32>
    %95 = arith.ori %82, %94 : vector<8x512xi1>
    %cst_34 = arith.constant -3.40282347E+38 : f32
    %96 = vector.broadcast %cst_34 : f32 to vector<8x512xf32>
    %97 = arith.select %94, %96, %84 : vector<8x512xi1>, vector<8x512xf32>
    %cst_35 = arith.constant dense<0xFF800000> : vector<8xf32>
    %98 = vector.multi_reduction <maximumf>, %97, %cst_35 [1] : vector<8x512xf32> to vector<8xf32>
    %99 = vector.shape_cast %98 : vector<8xf32> to vector<8x1xf32>
    %100 = vector.broadcast %99 : vector<8x1xf32> to vector<8x512xf32>
    %101 = arith.cmpf oeq, %97, %100 : vector<8x512xf32>
    %c512_i32_36 = arith.constant 512 : i32
    %102 = vector.broadcast %c512_i32_36 : i32 to vector<8x512xi32>
    %103 = arith.select %101, %16, %102 : vector<8x512xi1>, vector<8x512xi32>
    %cst_37 = arith.constant dense<2147483647> : vector<8xi32>
    %104 = vector.multi_reduction <minsi>, %103, %cst_37 [1] : vector<8x512xi32> to vector<8xi32>
    %105 = vector.shape_cast %104 : vector<8xi32> to vector<8x1xi32>
    %106 = vector.broadcast %105 : vector<8x1xi32> to vector<8x512xi32>
    %107 = arith.cmpi eq, %16, %106 : vector<8x512xi32>
    %108 = arith.ori %95, %107 : vector<8x512xi1>
    %cst_38 = arith.constant -3.40282347E+38 : f32
    %109 = vector.broadcast %cst_38 : f32 to vector<8x512xf32>
    %110 = arith.select %107, %109, %97 : vector<8x512xi1>, vector<8x512xf32>
    %cst_39 = arith.constant dense<0xFF800000> : vector<8xf32>
    %111 = vector.multi_reduction <maximumf>, %110, %cst_39 [1] : vector<8x512xf32> to vector<8xf32>
    %112 = vector.shape_cast %111 : vector<8xf32> to vector<8x1xf32>
    %113 = vector.broadcast %112 : vector<8x1xf32> to vector<8x512xf32>
    %114 = arith.cmpf oeq, %110, %113 : vector<8x512xf32>
    %c512_i32_40 = arith.constant 512 : i32
    %115 = vector.broadcast %c512_i32_40 : i32 to vector<8x512xi32>
    %116 = arith.select %114, %16, %115 : vector<8x512xi1>, vector<8x512xi32>
    %cst_41 = arith.constant dense<2147483647> : vector<8xi32>
    %117 = vector.multi_reduction <minsi>, %116, %cst_41 [1] : vector<8x512xi32> to vector<8xi32>
    %118 = vector.shape_cast %117 : vector<8xi32> to vector<8x1xi32>
    %119 = vector.broadcast %118 : vector<8x1xi32> to vector<8x512xi32>
    %120 = arith.cmpi eq, %16, %119 : vector<8x512xi32>
    %121 = arith.ori %108, %120 : vector<8x512xi1>
    %cst_42 = arith.constant -3.40282347E+38 : f32
    %122 = vector.broadcast %cst_42 : f32 to vector<8x512xf32>
    %123 = arith.select %120, %122, %110 : vector<8x512xi1>, vector<8x512xf32>
    %cst_43 = arith.constant dense<0xFF800000> : vector<8xf32>
    %124 = vector.multi_reduction <maximumf>, %123, %cst_43 [1] : vector<8x512xf32> to vector<8xf32>
    %125 = vector.shape_cast %124 : vector<8xf32> to vector<8x1xf32>
    %126 = vector.broadcast %125 : vector<8x1xf32> to vector<8x512xf32>
    %127 = arith.cmpf oeq, %123, %126 : vector<8x512xf32>
    %c512_i32_44 = arith.constant 512 : i32
    %128 = vector.broadcast %c512_i32_44 : i32 to vector<8x512xi32>
    %129 = arith.select %127, %16, %128 : vector<8x512xi1>, vector<8x512xi32>
    %cst_45 = arith.constant dense<2147483647> : vector<8xi32>
    %130 = vector.multi_reduction <minsi>, %129, %cst_45 [1] : vector<8x512xi32> to vector<8xi32>
    %131 = vector.shape_cast %130 : vector<8xi32> to vector<8x1xi32>
    %132 = vector.broadcast %131 : vector<8x1xi32> to vector<8x512xi32>
    %133 = arith.cmpi eq, %16, %132 : vector<8x512xi32>
    %134 = arith.ori %121, %133 : vector<8x512xi1>
    %cst_46 = arith.constant -3.40282347E+38 : f32
    %135 = vector.broadcast %cst_46 : f32 to vector<8x512xf32>
    %136 = arith.select %133, %135, %123 : vector<8x512xi1>, vector<8x512xf32>
    %cst_47 = arith.constant dense<0xFF800000> : vector<8xf32>
    %137 = vector.multi_reduction <maximumf>, %136, %cst_47 [1] : vector<8x512xf32> to vector<8xf32>
    %138 = vector.shape_cast %137 : vector<8xf32> to vector<8x1xf32>
    %139 = vector.broadcast %138 : vector<8x1xf32> to vector<8x512xf32>
    %140 = arith.cmpf oeq, %136, %139 : vector<8x512xf32>
    %c512_i32_48 = arith.constant 512 : i32
    %141 = vector.broadcast %c512_i32_48 : i32 to vector<8x512xi32>
    %142 = arith.select %140, %16, %141 : vector<8x512xi1>, vector<8x512xi32>
    %cst_49 = arith.constant dense<2147483647> : vector<8xi32>
    %143 = vector.multi_reduction <minsi>, %142, %cst_49 [1] : vector<8x512xi32> to vector<8xi32>
    %144 = vector.shape_cast %143 : vector<8xi32> to vector<8x1xi32>
    %145 = vector.broadcast %144 : vector<8x1xi32> to vector<8x512xi32>
    %146 = arith.cmpi eq, %16, %145 : vector<8x512xi32>
    %147 = arith.ori %134, %146 : vector<8x512xi1>
    %cst_50 = arith.constant 0.000000e+00 : f32
    %148 = vector.broadcast %cst_50 : f32 to vector<8x512xf32>
    %149 = arith.select %147, %20, %148 : vector<8x512xi1>, vector<8x512xf32>
    %150 = arith.index_cast %18 : i32 to index
    %c0_51 = arith.constant 0 : index
    %151 = vector.load %arg8[%150, %c0_51] : memref<8x512xf32, #tpu.memory_space<vmem>>, vector<8x512xf32>
    tpu.vector_store %arg8[%150, %c0_51], %149 {strides = array<i32>} : memref<8x512xf32, #tpu.memory_space<vmem>>, vector<8x512xf32>,
    %c1_i32 = arith.constant 1 : i32
    %c0_52 = arith.constant 0 : index
    %c0_53 = arith.constant 0 : index
    %152 = vector.load %arg8[%c0_52, %c0_53] : memref<8x512xf32, #tpu.memory_space<vmem>>, vector<8x512xf32>
    %c0_54 = arith.constant 0 : index
    %c0_55 = arith.constant 0 : index
    %153 = vector.load %arg5[%c0_54, %c0_55] : memref<512x128xbf16, #tpu.memory_space<vmem>>, vector<512x128xbf16>
    %c0_56 = arith.constant 0 : index
    %c0_57 = arith.constant 0 : index
    %154 = vector.load %arg6[%c0_56, %c0_57] : memref<512x128xbf16, #tpu.memory_space<vmem>>, vector<512x128xbf16>
    %155 = arith.truncf %152 : vector<8x512xf32> to vector<8x512xbf16>
    %156 = arith.extf %155 : vector<8x512xbf16> to vector<8x512xf32>
    %157 = arith.subf %152, %156 : vector<8x512xf32>
    %158 = arith.truncf %157 : vector<8x512xf32> to vector<8x512xbf16>
    %cst_58 = arith.constant dense<0.000000e+00> : vector<8x128xf32>
    %159 = tpu.matmul %155, %153, %cst_58 {dimension_numbers = #tpu.dot_dimension_numbers<[1], [0], [0], [1], [0, 0, 1, 1], [], []>} : vector<8x512xbf16>, vector<512x128xbf16>, vector<8x128xf32> -> vector<8x128xf32>
    %cst_59 = arith.constant dense<0.000000e+00> : vector<8x128xf32>
    %160 = tpu.matmul %158, %153, %cst_59 {dimension_numbers = #tpu.dot_dimension_numbers<[1], [0], [0], [1], [0, 0, 1, 1], [], []>} : vector<8x512xbf16>, vector<512x128xbf16>, vector<8x128xf32> -> vector<8x128xf32>
    %161 = arith.addf %159, %160 : vector<8x128xf32>
    %cst_60 = arith.constant dense<0.000000e+00> : vector<8x128xf32>
    %162 = tpu.matmul %155, %154, %cst_60 {dimension_numbers = #tpu.dot_dimension_numbers<[1], [0], [0], [1], [0, 0, 1, 1], [], []>} : vector<8x512xbf16>, vector<512x128xbf16>, vector<8x128xf32> -> vector<8x128xf32>
    %163 = arith.addf %161, %162 : vector<8x128xf32>
    %c0_61 = arith.constant 0 : index
    %c0_62 = arith.constant 0 : index
    %164 = vector.load %arg7[%c0_61, %c0_62] : memref<1x128xf32, #tpu.memory_space<vmem>>, vector<1x128xf32>
    %165 = vector.broadcast %164 : vector<1x128xf32> to vector<8x128xf32>
    %166 = arith.addf %163, %165 : vector<8x128xf32>
    %c0_63 = arith.constant 0 : index
    %c0_64 = arith.constant 0 : index
    %167 = vector.load %arg9[%c0_63, %c0_64] : memref<8x128xf32, #tpu.memory_space<vmem>>, vector<8x128xf32>
    tpu.vector_store %arg9[%c0_63, %c0_64], %166 {strides = array<i32>} : memref<8x128xf32, #tpu.memory_space<vmem>>, vector<8x128xf32>,
    return
  }
  func.func @transform_0(%arg0: i32) -> (i32, i32) {
    %c0_i32 = arith.constant 0 : i32
    %c0_i32_0 = arith.constant 0 : i32
    return %arg0, %c0_i32 : i32, i32
  }
  func.func @transform_1(%arg0: i32) -> (i32, i32) {
    %c0_i32 = arith.constant 0 : i32
    %c0_i32_0 = arith.constant 0 : i32
    %c0_i32_1 = arith.constant 0 : i32
    return %c0_i32, %c0_i32_0 : i32, i32
  }
  func.func @transform_2(%arg0: i32) -> (i32, i32) {
    %c0_i32 = arith.constant 0 : i32
    %c0_i32_0 = arith.constant 0 : i32
    %c0_i32_1 = arith.constant 0 : i32
    return %c0_i32, %c0_i32_0 : i32, i32
  }
  func.func @transform_3(%arg0: i32) -> (i32, i32) {
    %c0_i32 = arith.constant 0 : i32
    %c0_i32_0 = arith.constant 0 : i32
    %c0_i32_1 = arith.constant 0 : i32
    return %c0_i32, %c0_i32_0 : i32, i32
  }
  func.func @transform_4(%arg0: i32) -> (i32, i32) {
    %c0_i32 = arith.constant 0 : i32
    %c0_i32_0 = arith.constant 0 : i32
    %c0_i32_1 = arith.constant 0 : i32
    return %c0_i32, %c0_i32_0 : i32, i32
  }
  func.func @transform_5(%arg0: i32) -> (i32, i32) {
    %c0_i32 = arith.constant 0 : i32
    %c0_i32_0 = arith.constant 0 : i32
    %c0_i32_1 = arith.constant 0 : i32
    return %c0_i32, %c0_i32_0 : i32, i32
  }
  func.func @transform_6(%arg0: i32) -> (i32, i32) {
    %c0_i32 = arith.constant 0 : i32
    %c0_i32_0 = arith.constant 0 : i32
    %c0_i32_1 = arith.constant 0 : i32
    return %c0_i32, %c0_i32_0 : i32, i32
  }
  func.func @transform_7(%arg0: i32) -> (i32, i32) {
    %c0_i32 = arith.constant 0 : i32
    %c0_i32_0 = arith.constant 0 : i32
    return %arg0, %c0_i32 : i32, i32
  }
  func.func @transform_8(%arg0: i32) -> (i32, i32) {
    %c0_i32 = arith.constant 0 : i32
    %c0_i32_0 = arith.constant 0 : i32
    return %arg0, %c0_i32 : i32, i32
  }
}

</mosaic_0001>

<llo_original>
// kernel: tpu_custom_call.1
$region0: #{tpu_custom_call.1}
  #allocation0 [shape = 'u32[]', space=smem, size = 0x4, offset = 0x4, fixed_abs, tag = 'smem constant byte address 0x4 - core index']
  #allocation1 [shape = 'u32[144,128]{1,0:T(1,128)}', space=vmem, size = 0x12000, scoped, tag = 'internal scratch']
  %s0 = inlined_call_operand.hbm [shape: f32[16,128], index: 0, kind: input, shape index: {}]
  %s1 = inlined_call_operand.hbm [shape: bf16[128,512], index: 1, kind: input, shape index: {}]
  %s2 = inlined_call_operand.hbm [shape: bf16[128,512], index: 2, kind: input, shape index: {}]
  %s3 = inlined_call_operand.vmem [shape: f32[1,512], index: 3, kind: input, shape index: {}]
  %s4 = inlined_call_operand.hbm [shape: bf16[512,128], index: 4, kind: input, shape index: {}]
  %s5 = inlined_call_operand.hbm [shape: bf16[512,128], index: 5, kind: input, shape index: {}]
  %s6 = inlined_call_operand.vmem [shape: f32[1,128], index: 6, kind: input, shape index: {}]
  %s7 = inlined_call_operand.hbm [shape: f32[16,512], index: 7, kind: output, shape index: {0}]
  %s8 = inlined_call_operand.hbm [shape: f32[16,128], index: 8, kind: output, shape index: {1}]
  %9 = xla_tuple %s7, %s8
  %s10 = sld [smem:[#allocation0]]
  $region89: #{tpu_custom_call.1} parent=0
    _
  %s12 = ssub.s32 1, %s10
  %s13 = scalar_select 0, %s12, %s10
  $region1: #{tpu_custom_call.1} parent=0
    #allocation2 [shape = 'u8[8192]{0}', space=vmem, size = 0x2000, scoped, tag = 'input window, operand 0']
    #allocation3 [shape = 's32[2]{0}', space=sflag, size = 0x8, scoped, tag = 'scoped memory for tpu_custom_call.1']
    #allocation4 [shape = 's32[2]{0}', space=sflag, size = 0x8, scoped, tag = 'scoped memory for tpu_custom_call.1']
    #allocation5 [shape = 'u8[131072]{0}', space=vmem, size = 0x20000, scoped, tag = 'input window, operand 1, single buffered']
    #allocation6 [shape = 's32[1]{0}', space=sflag, size = 0x4, scoped, tag = 'scoped memory for tpu_custom_call.1']
    #allocation7 [shape = 'u8[131072]{0}', space=vmem, size = 0x20000, scoped, tag = 'input window, operand 2, single buffered']
    #allocation8 [shape = 'u8[131072]{0}', space=vmem, size = 0x20000, scoped, tag = 'input window, operand 4, single buffered']
    #allocation9 [shape = 's32[1]{0}', space=sflag, size = 0x4, scoped, tag = 'scoped memory for tpu_custom_call.1']
    #allocation10 [shape = 'u8[131072]{0}', space=vmem, size = 0x20000, scoped, tag = 'input window, operand 5, single buffered']
    #allocation11 [shape = 'u8[32768]{0}', space=vmem, size = 0x8000, scoped, tag = 'output window, operand 0']
    #allocation12 [shape = 'u8[8192]{0}', space=vmem, size = 0x2000, scoped, tag = 'output window, operand 1']
    #allocation13 [shape = 's32[2]{0}', space=sflag, size = 0x8, scoped, tag = 'scoped memory for tpu_custom_call.1']
    %14 = vsyncpa [#allocation3], 0
    %s15 = scalar_lea.sflag [#allocation3], 1
    %16 = vsyncpa %s15, 0
    %17 = vsyncpa [#allocation6], 0
    %18 = vsyncpa [#allocation9], 0
    %19 = vsyncpa [#allocation4], 0
    %s20 = scalar_lea.sflag [#allocation4], 1
    %21 = vsyncpa %s20, 0
    %22 = vsyncpa [#allocation13], 0
    %s23 = scalar_lea.sflag [#allocation13], 1
    %24 = vsyncpa %s23, 0
    loop: start=0, step=1, limit=4
    $region2: #{tpu_custom_call.1} parent=1 // loop_pre_header
      _
    $region3: #{tpu_custom_call.1} parent=1 // loop_header
      %s26 = sphi 0, %s30
      %p27 = scmp.ge.s32.totalorder %s26, 4
      %s36 = sphi 0, %s38
      %s39 = sphi 0, %s36
      %s40 = sphi 0, %s39
      %s56 = sphi 0, %s40
      %s60 = sphi 0, %s60
      %s62 = sphi 0, %s60
      %s63 = sphi 0, %s62
      %s77 = sphi 0, %s63
      %s81 = sphi 0, %s81
      %s83 = sphi 0, %s81
      %s84 = sphi 0, %s83
      %s98 = sphi 0, %s84
      %s102 = sphi 0, %s102
      %s104 = sphi 0, %s102
      %s105 = sphi 0, %s104
      %s119 = sphi 0, %s105
      %s123 = sphi 0, %s123
      %s125 = sphi 0, %s123
      %s126 = sphi 0, %s125
      %s140 = sphi 0, %s126
      %s144 = sphi 0, %s144
      %s146 = sphi 0, %s144
      %s147 = sphi 0, %s146
      %s161 = sphi 0, %s147
      %s165 = sphi 0, %s165
      %s167 = sphi 0, %s165
      %s168 = sphi 0, %s167
      %s182 = sphi 0, %s168
      %s188 = sphi 0, %s190
      %s191 = sphi 0, %s188
      %s192 = sphi 0, %s191
      %s208 = sphi 0, %s192
      %s214 = sphi 0, %s216
      %s217 = sphi 0, %s214
      %s218 = sphi 0, %s217
      %s234 = sphi 0, %s218
    $region4: #{tpu_custom_call.1} parent=1 // loop_header_branch
      %29 = sbr.rel (%p27) target = $region8
    $region5: #{tpu_custom_call.1} parent=1 // loop_body
      %s31 = ssub.s32 %s26, 1
      %s32 = ssub.s32 %s26, 2
      %s33 = sadd.s32 %s26, 1
      %s34 = ssub.s32 %s26, %s33
      %p35 = scmp.eq.s32.totalorder %s34, 0
      %s37 = sadd.s32 %s36, 1
      %s38 = scalar_select %p35, %s36, %s37
      %p41 = pneg %p35
      %p42 = scmp.eq.s32.totalorder %s26, 1
      %p43 = por %p41, %p42
      %p44 = scmp.ne.s32.totalorder %s36, %s39
      %p45 = scmp.eq.s32.totalorder %s26, 0
      %p46 = por %p44, %p45
      %p47 = scmp.ne.s32.totalorder %s36, %s39
      %p48 = scmp.eq.s32.totalorder %s31, 1
      %p49 = por %p47, %p48
      %p50 = scmp.ne.s32.totalorder %s39, %s40
      %p51 = scmp.eq.s32.totalorder %s31, 0
      %p52 = por %p50, %p51
      %p53 = scmp.ne.s32.totalorder %s39, %s40
      %p54 = scmp.eq.s32.totalorder %s32, 1
      %p55 = por %p53, %p54
      %p57 = scmp.ne.s32.totalorder %s40, %s56
      %p58 = scmp.eq.s32.totalorder %s32, 0
      %p59 = por %p57, %p58
      %s61 = sadd.s32 %s60, 1
      %p64 = scmp.eq.s32.totalorder %s26, 1
      %p65 = scmp.ne.s32.totalorder %s60, %s62
      %p66 = scmp.eq.s32.totalorder %s26, 0
      %p67 = por %p65, %p66
      %p68 = scmp.ne.s32.totalorder %s60, %s62
      %p69 = scmp.eq.s32.totalorder %s31, 1
      %p70 = por %p68, %p69
      %p71 = scmp.ne.s32.totalorder %s62, %s63
      %p72 = scmp.eq.s32.totalorder %s31, 0
      %p73 = por %p71, %p72
      %p74 = scmp.ne.s32.totalorder %s62, %s63
      %p75 = scmp.eq.s32.totalorder %s32, 1
      %p76 = por %p74, %p75
      %p78 = scmp.ne.s32.totalorder %s63, %s77
      %p79 = scmp.eq.s32.totalorder %s32, 0
      %p80 = por %p78, %p79
      %s82 = sadd.s32 %s81, 1
      %p85 = scmp.eq.s32.totalorder %s26, 1
      %p86 = scmp.ne.s32.totalorder %s81, %s83
      %p87 = scmp.eq.s32.totalorder %s26, 0
      %p88 = por %p86, %p87
      %p89 = scmp.ne.s32.totalorder %s81, %s83
      %p90 = scmp.eq.s32.totalorder %s31, 1
      %p91 = por %p89, %p90
      %p92 = scmp.ne.s32.totalorder %s83, %s84
      %p93 = scmp.eq.s32.totalorder %s31, 0
      %p94 = por %p92, %p93
      %p95 = scmp.ne.s32.totalorder %s83, %s84
      %p96 = scmp.eq.s32.totalorder %s32, 1
      %p97 = por %p95, %p96
      %p99 = scmp.ne.s32.totalorder %s84, %s98
      %p100 = scmp.eq.s32.totalorder %s32, 0
      %p101 = por %p99, %p100
      %s103 = sadd.s32 %s102, 1
      %p106 = scmp.eq.s32.totalorder %s26, 1
      %p107 = scmp.ne.s32.totalorder %s102, %s104
      %p108 = scmp.eq.s32.totalorder %s26, 0
      %p109 = por %p107, %p108
      %p110 = scmp.ne.s32.totalorder %s102, %s104
      %p111 = scmp.eq.s32.totalorder %s31, 1
      %p112 = por %p110, %p111
      %p113 = scmp.ne.s32.totalorder %s104, %s105
      %p114 = scmp.eq.s32.totalorder %s31, 0
      %p115 = por %p113, %p114
      %p116 = scmp.ne.s32.totalorder %s104, %s105
      %p117 = scmp.eq.s32.totalorder %s32, 1
      %p118 = por %p116, %p117
      %p120 = scmp.ne.s32.totalorder %s105, %s119
      %p121 = scmp.eq.s32.totalorder %s32, 0
      %p122 = por %p120, %p121
      %s124 = sadd.s32 %s123, 1
      %p127 = scmp.eq.s32.totalorder %s26, 1
      %p128 = scmp.ne.s32.totalorder %s123, %s125
      %p129 = scmp.eq.s32.totalorder %s26, 0
      %p130 = por %p128, %p129
      %p131 = scmp.ne.s32.totalorder %s123, %s125
      %p132 = scmp.eq.s32.totalorder %s31, 1
      %p133 = por %p131, %p132
      %p134 = scmp.ne.s32.totalorder %s125, %s126
      %p135 = scmp.eq.s32.totalorder %s31, 0
      %p136 = por %p134, %p135
      %p137 = scmp.ne.s32.totalorder %s125, %s126
      %p138 = scmp.eq.s32.totalorder %s32, 1
      %p139 = por %p137, %p138
      %p141 = scmp.ne.s32.totalorder %s126, %s140
      %p142 = scmp.eq.s32.totalorder %s32, 0
      %p143 = por %p141, %p142
      %s145 = sadd.s32 %s144, 1
      %p148 = scmp.eq.s32.totalorder %s26, 1
      %p149 = scmp.ne.s32.totalorder %s144, %s146
      %p150 = scmp.eq.s32.totalorder %s26, 0
      %p151 = por %p149, %p150
      %p152 = scmp.ne.s32.totalorder %s144, %s146
      %p153 = scmp.eq.s32.totalorder %s31, 1
      %p154 = por %p152, %p153
      %p155 = scmp.ne.s32.totalorder %s146, %s147
      %p156 = scmp.eq.s32.totalorder %s31, 0
      %p157 = por %p155, %p156
      %p158 = scmp.ne.s32.totalorder %s146, %s147
      %p159 = scmp.eq.s32.totalorder %s32, 1
      %p160 = por %p158, %p159
      %p162 = scmp.ne.s32.totalorder %s147, %s161
      %p163 = scmp.eq.s32.totalorder %s32, 0
      %p164 = por %p162, %p163
      %s166 = sadd.s32 %s165, 1
      %p169 = scmp.eq.s32.totalorder %s26, 1
      %p170 = scmp.ne.s32.totalorder %s165, %s167
      %p171 = scmp.eq.s32.totalorder %s26, 0
      %p172 = por %p170, %p171
      %p173 = scmp.ne.s32.totalorder %s165, %s167
      %p174 = scmp.eq.s32.totalorder %s31, 1
      %p175 = por %p173, %p174
      %p176 = scmp.ne.s32.totalorder %s167, %s168
      %p177 = scmp.eq.s32.totalorder %s31, 0
      %p178 = por %p176, %p177
      %p179 = scmp.ne.s32.totalorder %s167, %s168
      %p180 = scmp.eq.s32.totalorder %s32, 1
      %p181 = por %p179, %p180
      %p183 = scmp.ne.s32.totalorder %s168, %s182
      %p184 = scmp.eq.s32.totalorder %s32, 0
      %p185 = por %p183, %p184
      %s186 = ssub.s32 %s26, %s33
      %p187 = scmp.eq.s32.totalorder %s186, 0
      %s189 = sadd.s32 %s188, 1
      %s190 = scalar_select %p187, %s188, %s189
      %p193 = pneg %p187
      %p194 = scmp.eq.s32.totalorder %s26, 1
      %p195 = por %p193, %p194
      %p196 = scmp.ne.s32.totalorder %s188, %s191
      %p197 = scmp.eq.s32.totalorder %s26, 0
      %p198 = por %p196, %p197
      %p199 = scmp.ne.s32.totalorder %s188, %s191
      %p200 = scmp.eq.s32.totalorder %s31, 1
      %p201 = por %p199, %p200
      %p202 = scmp.ne.s32.totalorder %s191, %s192
      %p203 = scmp.eq.s32.totalorder %s31, 0
      %p204 = por %p202, %p203
      %p205 = scmp.ne.s32.totalorder %s191, %s192
      %p206 = scmp.eq.s32.totalorder %s32, 1
      %p207 = por %p205, %p206
      %p209 = scmp.ne.s32.totalorder %s192, %s208
      %p210 = scmp.eq.s32.totalorder %s32, 0
      %p211 = por %p209, %p210
      %s212 = ssub.s32 %s26, %s33
      %p213 = scmp.eq.s32.totalorder %s212, 0
      %s215 = sadd.s32 %s214, 1
      %s216 = scalar_select %p213, %s214, %s215
      %p219 = pneg %p213
      %p220 = scmp.eq.s32.totalorder %s26, 1
      %p221 = por %p219, %p220
      %p222 = scmp.ne.s32.totalorder %s214, %s217
      %p223 = scmp.eq.s32.totalorder %s26, 0
      %p224 = por %p222, %p223
      %p225 = scmp.ne.s32.totalorder %s214, %s217
      %p226 = scmp.eq.s32.totalorder %s31, 1
      %p227 = por %p225, %p226
      %p228 = scmp.ne.s32.totalorder %s217, %s218
      %p229 = scmp.eq.s32.totalorder %s31, 0
      %p230 = por %p228, %p229
      %p231 = scmp.ne.s32.totalorder %s217, %s218
      %p232 = scmp.eq.s32.totalorder %s32, 1
      %p233 = por %p231, %p232
      %p235 = scmp.ne.s32.totalorder %s218, %s234
      %p236 = scmp.eq.s32.totalorder %s32, 0
      %p237 = por %p235, %p236
      %p238 = scmp.le.s32.totalorder 1, %s26
      %p239 = scmp.lt.s32.totalorder %s26, 3
      %p240 = pnand %p238, %p239
      %p241 = pneg %p240
      // Predicated region
      $region9: #{tpu_custom_call.1} parent=5 // pred_check
        _
      $region10: #{tpu_custom_call.1} parent=5 // pred_check_branch
        %243 = sbr.rel (%p240) target = $region12
      $region11: #{tpu_custom_call.1} parent=5 // pred_region
        %s244 = ssub.s32 %s26, 1
        // Predicated region
        $region13: #{tpu_custom_call.1} parent=11 // pred_check
          %p245 = pneg %p73
        $region14: #{tpu_custom_call.1} parent=11 // pred_check_branch
          %247 = sbr.rel (%p245) target = $region16
        $region15: #{tpu_custom_call.1} parent=11 // pred_region
          %s249 = ssub.s32 4096, 4096
          %250 = vsyncadd [#allocation6], %s249
          %s251 = sshll.u32 [#allocation5], 4
          %s252 = int_to_ptr.vmem [resolvable:$true] %s251
          %257 = dma.hbm_to_vmem [thread:$0]  %s1, 4096, %s252, [#allocation6], 256, 256, 16
        $region16: #{tpu_custom_call.1} parent=11 // pred_fallthru
          _
        // Predicated region
        $region17: #{tpu_custom_call.1} parent=11 // pred_check
          %p258 = pneg %p94
        $region18: #{tpu_custom_call.1} parent=11 // pred_check_branch
          %260 = sbr.rel (%p258) target = $region20
        $region19: #{tpu_custom_call.1} parent=11 // pred_region
          %s262 = ssub.s32 4096, 4096
          %263 = vsyncadd [#allocation6], %s262
          %s264 = sshll.u32 [#allocation7], 4
          %s265 = int_to_ptr.vmem [resolvable:$true] %s264
          %270 = dma.hbm_to_vmem [thread:$0]  %s2, 4096, %s265, [#allocation6], 256, 256, 16
        $region20: #{tpu_custom_call.1} parent=11 // pred_fallthru
          _
        // Predicated region
        $region21: #{tpu_custom_call.1} parent=11 // pred_check
          %p271 = pneg %p115
        $region22: #{tpu_custom_call.1} parent=11 // pred_check_branch
          %273 = sbr.rel (%p271) target = $region24
        $region23: #{tpu_custom_call.1} parent=11 // pred_region
          _
        $region24: #{tpu_custom_call.1} parent=11 // pred_fallthru
          _
        // Predicated region
        $region25: #{tpu_custom_call.1} parent=11 // pred_check
          %p274 = pneg %p136
        $region26: #{tpu_custom_call.1} parent=11 // pred_check_branch
          %276 = sbr.rel (%p274) target = $region28
        $region27: #{tpu_custom_call.1} parent=11 // pred_region
          %s278 = ssub.s32 4096, 4096
          %279 = vsyncadd [#allocation9], %s278
          %s280 = sshll.u32 [#allocation8], 4
          %s281 = int_to_ptr.vmem [resolvable:$true] %s280
          %286 = dma.hbm_to_vmem [thread:$0]  %s4, 4096, %s281, [#allocation9], 64, 64, 4
        $region28: #{tpu_custom_call.1} parent=11 // pred_fallthru
          _
        // Predicated region
        $region29: #{tpu_custom_call.1} parent=11 // pred_check
          %p287 = pneg %p157
        $region30: #{tpu_custom_call.1} parent=11 // pred_check_branch
          %289 = sbr.rel (%p287) target = $region32
        $region31: #{tpu_custom_call.1} parent=11 // pred_region
          %s291 = ssub.s32 4096, 4096
          %292 = vsyncadd [#allocation9], %s291
          %s293 = sshll.u32 [#allocation10], 4
          %s294 = int_to_ptr.vmem [resolvable:$true] %s293
          %299 = dma.hbm_to_vmem [thread:$0]  %s5, 4096, %s294, [#allocation9], 64, 64, 4
        $region32: #{tpu_custom_call.1} parent=11 // pred_fallthru
          _
        // Predicated region
        $region33: #{tpu_custom_call.1} parent=11 // pred_check
          %p300 = pneg %p178
        $region34: #{tpu_custom_call.1} parent=11 // pred_check_branch
          %302 = sbr.rel (%p300) target = $region36
        $region35: #{tpu_custom_call.1} parent=11 // pred_region
          _
        $region36: #{tpu_custom_call.1} parent=11 // pred_fallthru
          _
      $region12: #{tpu_custom_call.1} parent=5 // pred_fallthru
        _
      %p303 = scmp.lt.s32.totalorder %s26, 2
      // Predicated region
      $region37: #{tpu_custom_call.1} parent=5 // pred_check
        %p304 = pneg %p303
      $region38: #{tpu_custom_call.1} parent=5 // pred_check_branch
        %306 = sbr.rel (%p304) target = $region40
      $region39: #{tpu_custom_call.1} parent=5 // pred_region
        // Predicated region
        $region41: #{tpu_custom_call.1} parent=39 // pred_check
          %p307 = pneg %p46
        $region42: #{tpu_custom_call.1} parent=39 // pred_check_branch
          %309 = sbr.rel (%p307) target = $region44
        $region43: #{tpu_custom_call.1} parent=39 // pred_region
          %s310 = sand.u32 %s36, 1
          %s311 = scalar_lea.sflag [#allocation3], %s310
          %s312 = sand.u32 %s36, 1
          %s313 = smul.addr %s312, 8
          %s314 = scalar_lea.vmem [#allocation2], %s313
          %s316 = ssub.s32 128, 128
          %317 = vsyncadd %s311, %s316
          %s318 = smul.addr %s26, 128
          %s319 = scalar_lea.hbm %s0, %s318
          %s321 = sshll.u32 %s314, 4
          %s322 = int_to_ptr.vmem [resolvable:$true] %s321
          %324 = dma.hbm_to_vmem [thread:$0]  %s319, 128, %s322, %s311
        $region44: #{tpu_custom_call.1} parent=39 // pred_fallthru
          _
      $region40: #{tpu_custom_call.1} parent=5 // pred_fallthru
        _
      %p325 = scmp.le.s32.totalorder 1, %s26
      %p326 = scmp.lt.s32.totalorder %s26, 3
      %p327 = pnand %p325, %p326
      %p328 = pneg %p327
      // Predicated region
      $region45: #{tpu_custom_call.1} parent=5 // pred_check
        _
      $region46: #{tpu_custom_call.1} parent=5 // pred_check_branch
        %330 = sbr.rel (%p327) target = $region48
      $region47: #{tpu_custom_call.1} parent=5 // pred_region
        %s331 = ssub.s32 %s26, 1
        %s332 = sand.u32 %s39, 1
        %s333 = scalar_lea.sflag [#allocation3], %s332
        %s334 = sand.u32 %s39, 1
        %s335 = smul.addr %s334, 8
        %s336 = scalar_lea.vmem [#allocation2], %s335
        // Predicated region
        $region49: #{tpu_custom_call.1} parent=47 // pred_check
          %p337 = pneg %p52
        $region50: #{tpu_custom_call.1} parent=47 // pred_check_branch
          %339 = sbr.rel (%p337) target = $region52
        $region51: #{tpu_custom_call.1} parent=47 // pred_region
          %340 = dma.done %s333, 128
        $region52: #{tpu_custom_call.1} parent=47 // pred_fallthru
          _
        // Predicated region
        $region53: #{tpu_custom_call.1} parent=47 // pred_check
          %p341 = pneg %p73
        $region54: #{tpu_custom_call.1} parent=47 // pred_check_branch
          %343 = sbr.rel (%p341) target = $region56
        $region55: #{tpu_custom_call.1} parent=47 // pred_region
          %344 = dma.done [#allocation6], 4096
        $region56: #{tpu_custom_call.1} parent=47 // pred_fallthru
          _
        // Predicated region
        $region57: #{tpu_custom_call.1} parent=47 // pred_check
          %p345 = pneg %p94
        $region58: #{tpu_custom_call.1} parent=47 // pred_check_branch
          %347 = sbr.rel (%p345) target = $region60
        $region59: #{tpu_custom_call.1} parent=47 // pred_region
          %348 = dma.done [#allocation6], 4096
        $region60: #{tpu_custom_call.1} parent=47 // pred_fallthru
          _
        // Predicated region
        $region61: #{tpu_custom_call.1} parent=47 // pred_check
          %p349 = pneg %p136
        $region62: #{tpu_custom_call.1} parent=47 // pred_check_branch
          %351 = sbr.rel (%p349) target = $region64
        $region63: #{tpu_custom_call.1} parent=47 // pred_region
          %352 = dma.done [#allocation9], 4096
        $region64: #{tpu_custom_call.1} parent=47 // pred_fallthru
          _
        // Predicated region
        $region65: #{tpu_custom_call.1} parent=47 // pred_check
          %p353 = pneg %p157
        $region66: #{tpu_custom_call.1} parent=47 // pred_check_branch
          %355 = sbr.rel (%p353) target = $region68
        $region67: #{tpu_custom_call.1} parent=47 // pred_region
          %356 = dma.done [#allocation9], 4096
        $region68: #{tpu_custom_call.1} parent=47 // pred_fallthru
          _
        %s357 = sand.u32 %s39, 1
        %s358 = scalar_lea.sflag [#allocation3], %s357
        %s359 = sand.u32 %s39, 1
        %s360 = smul.addr %s359, 8
        %s361 = scalar_lea.vmem [#allocation2], %s360
        %p362 = pneg %p52
        %p363 = pneg %p49
        %p364 = pneg %p73
        %p365 = pneg %p70
        %p366 = pneg %p94
        %p367 = pneg %p91
        %p368 = pneg %p115
        %p369 = pneg %p112
        %p370 = pneg %p136
        %p371 = pneg %p133
        %p372 = pneg %p157
        %p373 = pneg %p154
        %p374 = pneg %p178
        %p375 = pneg %p175
        %p376 = pneg %p204
        %p377 = pneg %p201
        %s378 = sand.u32 %s191, 1
        %s379 = scalar_lea.sflag [#allocation4], %s378
        %s380 = sand.u32 %s191, 1
        %s381 = smul.addr %s380, 32
        %s382 = scalar_lea.vmem [#allocation11], %s381
        %p383 = pneg %p230
        %p384 = pneg %p227
        %s385 = sand.u32 %s217, 1
        %s386 = scalar_lea.sflag [#allocation13], %s385
        %s387 = sand.u32 %s217, 1
        %s388 = smul.addr %s387, 8
        %s389 = scalar_lea.vmem [#allocation12], %s388
        %v391 = vld [vmem:[%s336] sm:$0xff]
        %v392 = vld [vmem:[#allocation5] sm:$0xff]
        %v393 = vld [vmem:[#allocation5 + $0x8] sm:$0xff]
        %v394 = vld [vmem:[#allocation5 + $0x10] sm:$0xff]
        %v395 = vld [vmem:[#allocation5 + $0x18] sm:$0xff]
        %v396 = vld [vmem:[#allocation5 + $0x20] sm:$0xff]
        %v397 = vld [vmem:[#allocation5 + $0x28] sm:$0xff]
        %v398 = vld [vmem:[#allocation5 + $0x30] sm:$0xff]
        %v399 = vld [vmem:[#allocation5 + $0x38] sm:$0xff]
        %v400 = vld [vmem:[#allocation5 + $0x40] sm:$0xff]
        %v401 = vld [vmem:[#allocation5 + $0x48] sm:$0xff]
        %v402 = vld [vmem:[#allocation5 + $0x50] sm:$0xff]
        %v403 = vld [vmem:[#allocation5 + $0x58] sm:$0xff]
        %v404 = vld [vmem:[#allocation5 + $0x60] sm:$0xff]
        %v405 = vld [vmem:[#allocation5 + $0x68] sm:$0xff]
        %v406 = vld [vmem:[#allocation5 + $0x70] sm:$0xff]
        %v407 = vld [vmem:[#allocation5 + $0x78] sm:$0xff]
        %v408 = vld [vmem:[#allocation5 + $0x80] sm:$0xff]
        %v409 = vld [vmem:[#allocation5 + $0x88] sm:$0xff]
        %v410 = vld [vmem:[#allocation5 + $0x90] sm:$0xff]
        %v411 = vld [vmem:[#allocation5 + $0x98] sm:$0xff]
        %v412 = vld [vmem:[#allocation5 + $0xa0] sm:$0xff]
        %v413 = vld [vmem:[#allocation5 + $0xa8] sm:$0xff]
        %v414 = vld [vmem:[#allocation5 + $0xb0] sm:$0xff]
        %v415 = vld [vmem:[#allocation5 + $0xb8] sm:$0xff]
        %v416 = vld [vmem:[#allocation5 + $0xc0] sm:$0xff]
        %v417 = vld [vmem:[#allocation5 + $0xc8] sm:$0xff]
        %v418 = vld [vmem:[#allocation5 + $0xd0] sm:$0xff]
        %v419 = vld [vmem:[#allocation5 + $0xd8] sm:$0xff]
        %v420 = vld [vmem:[#allocation5 + $0xe0] sm:$0xff]
        %v421 = vld [vmem:[#allocation5 + $0xe8] sm:$0xff]
        %v422 = vld [vmem:[#allocation5 + $0xf0] sm:$0xff]
        %v423 = vld [vmem:[#allocation5 + $0xf8] sm:$0xff]
        %v424 = vld [vmem:[#allocation7] sm:$0xff]
        %v425 = vld [vmem:[#allocation7 + $0x8] sm:$0xff]
        %v426 = vld [vmem:[#allocation7 + $0x10] sm:$0xff]
        %v427 = vld [vmem:[#allocation7 + $0x18] sm:$0xff]
        %v428 = vld [vmem:[#allocation7 + $0x20] sm:$0xff]
        %v429 = vld [vmem:[#allocation7 + $0x28] sm:$0xff]
        %v430 = vld [vmem:[#allocation7 + $0x30] sm:$0xff]
        %v431 = vld [vmem:[#allocation7 + $0x38] sm:$0xff]
        %v432 = vld [vmem:[#allocation7 + $0x40] sm:$0xff]
        %v433 = vld [vmem:[#allocation7 + $0x48] sm:$0xff]
        %v434 = vld [vmem:[#allocation7 + $0x50] sm:$0xff]
        %v435 = vld [vmem:[#allocation7 + $0x58] sm:$0xff]
        %v436 = vld [vmem:[#allocation7 + $0x60] sm:$0xff]
        %v437 = vld [vmem:[#allocation7 + $0x68] sm:$0xff]
        %v438 = vld [vmem:[#allocation7 + $0x70] sm:$0xff]
        %v439 = vld [vmem:[#allocation7 + $0x78] sm:$0xff]
        %v440 = vld [vmem:[#allocation7 + $0x80] sm:$0xff]
        %v441 = vld [vmem:[#allocation7 + $0x88] sm:$0xff]
        %v442 = vld [vmem:[#allocation7 + $0x90] sm:$0xff]
        %v443 = vld [vmem:[#allocation7 + $0x98] sm:$0xff]
        %v444 = vld [vmem:[#allocation7 + $0xa0] sm:$0xff]
        %v445 = vld [vmem:[#allocation7 + $0xa8] sm:$0xff]
        %v446 = vld [vmem:[#allocation7 + $0xb0] sm:$0xff]
        %v447 = vld [vmem:[#allocation7 + $0xb8] sm:$0xff]
        %v448 = vld [vmem:[#allocation7 + $0xc0] sm:$0xff]
        %v449 = vld [vmem:[#allocation7 + $0xc8] sm:$0xff]
        %v450 = vld [vmem:[#allocation7 + $0xd0] sm:$0xff]
        %v451 = vld [vmem:[#allocation7 + $0xd8] sm:$0xff]
        %v452 = vld [vmem:[#allocation7 + $0xe0] sm:$0xff]
        %v453 = vld [vmem:[#allocation7 + $0xe8] sm:$0xff]
        %v454 = vld [vmem:[#allocation7 + $0xf0] sm:$0xff]
        %v455 = vld [vmem:[#allocation7 + $0xf8] sm:$0xff]
        %v456 = vpack.c.bf16 %v391, %v391
        %v457 = vunpack.c.l.bf16 %v456
        %v458 = vsub.f32 %v391, %v457
        %v459 = vpack.c.bf16 %v458, %v458
        %v492 = vunpack.c.l.b16 %v392
        %v493 = vunpack.c.h.b16 %v392
        %v494 = vunpack.c.l.b16 %v393
        %v495 = vunpack.c.h.b16 %v393
        %v496 = vunpack.c.l.b16 %v394
        %v497 = vunpack.c.h.b16 %v394
        %v498 = vunpack.c.l.b16 %v395
        %v499 = vunpack.c.h.b16 %v395
        %v500 = vunpack.c.l.b16 %v396
        %v501 = vunpack.c.h.b16 %v396
        %v502 = vunpack.c.l.b16 %v397
        %v503 = vunpack.c.h.b16 %v397
        %v504 = vunpack.c.l.b16 %v398
        %v505 = vunpack.c.h.b16 %v398
        %v506 = vunpack.c.l.b16 %v399
        %v507 = vunpack.c.h.b16 %v399
        %v508 = vunpack.c.l.b16 %v400
        %v509 = vunpack.c.h.b16 %v400
        %v510 = vunpack.c.l.b16 %v401
        %v511 = vunpack.c.h.b16 %v401
        %v512 = vunpack.c.l.b16 %v402
        %v513 = vunpack.c.h.b16 %v402
        %v514 = vunpack.c.l.b16 %v403
        %v515 = vunpack.c.h.b16 %v403
        %v516 = vunpack.c.l.b16 %v404
        %v517 = vunpack.c.h.b16 %v404
        %v518 = vunpack.c.l.b16 %v405
        %v519 = vunpack.c.h.b16 %v405
        %v520 = vunpack.c.l.b16 %v406
        %v521 = vunpack.c.h.b16 %v406
        %v522 = vunpack.c.l.b16 %v407
        %v523 = vunpack.c.h.b16 %v407
        %v524 = vunpack.c.l.b16 %v408
        %v525 = vunpack.c.h.b16 %v408
        %v526 = vunpack.c.l.b16 %v409
        %v527 = vunpack.c.h.b16 %v409
        %v528 = vunpack.c.l.b16 %v410
        %v529 = vunpack.c.h.b16 %v410
        %v530 = vunpack.c.l.b16 %v411
        %v531 = vunpack.c.h.b16 %v411
        %v532 = vunpack.c.l.b16 %v412
        %v533 = vunpack.c.h.b16 %v412
        %v534 = vunpack.c.l.b16 %v413
        %v535 = vunpack.c.h.b16 %v413
        %v536 = vunpack.c.l.b16 %v414
        %v537 = vunpack.c.h.b16 %v414
        %v538 = vunpack.c.l.b16 %v415
        %v539 = vunpack.c.h.b16 %v415
        %v540 = vunpack.c.l.b16 %v416
        %v541 = vunpack.c.h.b16 %v416
        %v542 = vunpack.c.l.b16 %v417
        %v543 = vunpack.c.h.b16 %v417
        %v544 = vunpack.c.l.b16 %v418
        %v545 = vunpack.c.h.b16 %v418
        %v546 = vunpack.c.l.b16 %v419
        %v547 = vunpack.c.h.b16 %v419
        %v548 = vunpack.c.l.b16 %v420
        %v549 = vunpack.c.h.b16 %v420
        %v550 = vunpack.c.l.b16 %v421
        %v551 = vunpack.c.h.b16 %v421
        %v552 = vunpack.c.l.b16 %v422
        %v553 = vunpack.c.h.b16 %v422
        %v554 = vunpack.c.l.b16 %v423
        %v555 = vunpack.c.h.b16 %v423
        %v556 = vpack.c.b16 %v496, %v492
        %v557 = vpack.c.b16 %v497, %v493
        %v558 = vpack.c.b16 %v498, %v494
        %v559 = vpack.c.b16 %v499, %v495
        %v560 = vpack.c.b16 %v504, %v500
        %v561 = vpack.c.b16 %v505, %v501
        %v562 = vpack.c.b16 %v506, %v502
        %v563 = vpack.c.b16 %v507, %v503
        %v564 = vpack.c.b16 %v512, %v508
        %v565 = vpack.c.b16 %v513, %v509
        %v566 = vpack.c.b16 %v514, %v510
        %v567 = vpack.c.b16 %v515, %v511
        %v568 = vpack.c.b16 %v520, %v516
        %v569 = vpack.c.b16 %v521, %v517
        %v570 = vpack.c.b16 %v522, %v518
        %v571 = vpack.c.b16 %v523, %v519
        %v572 = vpack.c.b16 %v528, %v524
        %v573 = vpack.c.b16 %v529, %v525
        %v574 = vpack.c.b16 %v530, %v526
        %v575 = vpack.c.b16 %v531, %v527
        %v576 = vpack.c.b16 %v536, %v532
        %v577 = vpack.c.b16 %v537, %v533
        %v578 = vpack.c.b16 %v538, %v534
        %v579 = vpack.c.b16 %v539, %v535
        %v580 = vpack.c.b16 %v544, %v540
        %v581 = vpack.c.b16 %v545, %v541
        %v582 = vpack.c.b16 %v546, %v542
        %v583 = vpack.c.b16 %v547, %v543
        %v584 = vpack.c.b16 %v552, %v548
        %v585 = vpack.c.b16 %v553, %v549
        %v586 = vpack.c.b16 %v554, %v550
        %v587 = vpack.c.b16 %v555, %v551
        %620 = vmatprep.subr.bf16.mxu0 %v557
        %621 = vmatpush1.bf16.msra.mxu0 %v556
        %622 = vmatprep.subr.bf16.mxu0 %v561
        %623 = vmatpush1.bf16.msra.mxu0 %v560
        %624 = vmatprep.subr.bf16.mxu0 %v565
        %625 = vmatpush1.bf16.msra.mxu0 %v564
        %626 = vmatprep.subr.bf16.mxu0 %v569
        %627 = vmatpush1.bf16.msra.mxu0 %v568
        %628 = vmatprep.subr.bf16.mxu0 %v573
        %629 = vmatpush1.bf16.msra.mxu0 %v572
        %630 = vmatprep.subr.bf16.mxu0 %v577
        %631 = vmatpush1.bf16.msra.mxu0 %v576
        %632 = vmatprep.subr.bf16.mxu0 %v581
        %633 = vmatpush1.bf16.msra.mxu0 %v580
        %634 = vmatprep.subr.bf16.mxu0 %v585
        %635 = vmatpush1.bf16.msra.mxu0 %v584
        %636 = vmatprep.subr.bf16.mxu0 0
        %637 = vmatpush1.bf16.msra.mxu0 0
        %638 = vmatprep.subr.bf16.mxu0 0
        %639 = vmatpush1.bf16.msra.mxu0 0
        %640 = vmatprep.subr.bf16.mxu0 0
        %641 = vmatpush1.bf16.msra.mxu0 0
        %642 = vmatprep.subr.bf16.mxu0 0
        %643 = vmatpush1.bf16.msra.mxu0 0
        %644 = vmatprep.subr.bf16.mxu0 0
        %645 = vmatpush1.bf16.msra.mxu0 0
        %646 = vmatprep.subr.bf16.mxu0 0
        %647 = vmatpush1.bf16.msra.mxu0 0
        %648 = vmatprep.subr.bf16.mxu0 0
        %649 = vmatpush1.bf16.msra.mxu0 0
        %650 = vmatprep.subr.bf16.mxu0 0
        %651 = vmatpush1.bf16.msra.mxu0 0
        %652 = vmatprep.mubr.bf16.mxu0 0
        %653 = vmatmul.mubr.bf16.gmra.mrb[0].mxu0 %v459
        %v654 = vpop.f32.mrb[0].mxu0
        %v655 = vadd.f32 0.0, %v654
        %v656 = vpop.f32.mrb[0].mxu0
        %v657 = vadd.f32 0.0, %v656
        %v658 = vpop.f32.mrb[0].mxu0
        %v659 = vpop.f32.mrb[0].mxu0
        %660 = vdwg.mxu0
        %661 = vmatprep.subr.bf16.mxu0 %v559
        %662 = vmatpush1.bf16.msra.mxu0 %v558
        %663 = vmatprep.subr.bf16.mxu0 %v563
        %664 = vmatpush1.bf16.msra.mxu0 %v562
        %665 = vmatprep.subr.bf16.mxu0 %v567
        %666 = vmatpush1.bf16.msra.mxu0 %v566
        %667 = vmatprep.subr.bf16.mxu0 %v571
        %668 = vmatpush1.bf16.msra.mxu0 %v570
        %669 = vmatprep.subr.bf16.mxu0 %v575
        %670 = vmatpush1.bf16.msra.mxu0 %v574
        %671 = vmatprep.subr.bf16.mxu0 %v579
        %672 = vmatpush1.bf16.msra.mxu0 %v578
        %673 = vmatprep.subr.bf16.mxu0 %v583
        %674 = vmatpush1.bf16.msra.mxu0 %v582
        %675 = vmatprep.subr.bf16.mxu0 %v587
        %676 = vmatpush1.bf16.msra.mxu0 %v586
        %677 = vmatprep.subr.bf16.mxu0 0
        %678 = vmatpush1.bf16.msra.mxu0 0
        %679 = vmatprep.subr.bf16.mxu0 0
        %680 = vmatpush1.bf16.msra.mxu0 0
        %681 = vmatprep.subr.bf16.mxu0 0
        %682 = vmatpush1.bf16.msra.mxu0 0
        %683 = vmatprep.subr.bf16.mxu0 0
        %684 = vmatpush1.bf16.msra.mxu0 0
        %685 = vmatprep.subr.bf16.mxu0 0
        %686 = vmatpush1.bf16.msra.mxu0 0
        %687 = vmatprep.subr.bf16.mxu0 0
        %688 = vmatpush1.bf16.msra.mxu0 0
        %689 = vmatprep.subr.bf16.mxu0 0
        %690 = vmatpush1.bf16.msra.mxu0 0
        %691 = vmatprep.subr.bf16.mxu0 0
        %692 = vmatpush1.bf16.msra.mxu0 0
        %693 = vmatprep.mubr.bf16.mxu0 0
        %694 = vmatmul.mubr.bf16.gmra.mrb[0].mxu0 %v459
        %v695 = vpop.f32.mrb[0].mxu0
        %v696 = vadd.f32 0.0, %v695
        %v697 = vpop.f32.mrb[0].mxu0
        %v698 = vadd.f32 0.0, %v697
        %v699 = vpop.f32.mrb[0].mxu0
        %v700 = vpop.f32.mrb[0].mxu0
        %701 = vdwg.mxu0
        %702 = vmatprep.subr.bf16.mxu0 %v557
        %703 = vmatpush1.bf16.msra.mxu0 %v556
        %704 = vmatprep.subr.bf16.mxu0 %v561
        %705 = vmatpush1.bf16.msra.mxu0 %v560
        %706 = vmatprep.subr.bf16.mxu0 %v565
        %707 = vmatpush1.bf16.msra.mxu0 %v564
        %708 = vmatprep.subr.bf16.mxu0 %v569
        %709 = vmatpush1.bf16.msra.mxu0 %v568
        %710 = vmatprep.subr.bf16.mxu0 %v573
        %711 = vmatpush1.bf16.msra.mxu0 %v572
        %712 = vmatprep.subr.bf16.mxu0 %v577
        %713 = vmatpush1.bf16.msra.mxu0 %v576
        %714 = vmatprep.subr.bf16.mxu0 %v581
        %715 = vmatpush1.bf16.msra.mxu0 %v580
        %716 = vmatprep.subr.bf16.mxu0 %v585
        %717 = vmatpush1.bf16.msra.mxu0 %v584
        %718 = vmatprep.subr.bf16.mxu0 0
        %719 = vmatpush1.bf16.msra.mxu0 0
        %720 = vmatprep.subr.bf16.mxu0 0
        %721 = vmatpush1.bf16.msra.mxu0 0
        %722 = vmatprep.subr.bf16.mxu0 0
        %723 = vmatpush1.bf16.msra.mxu0 0
        %724 = vmatprep.subr.bf16.mxu0 0
        %725 = vmatpush1.bf16.msra.mxu0 0
        %726 = vmatprep.subr.bf16.mxu0 0
        %727 = vmatpush1.bf16.msra.mxu0 0
        %728 = vmatprep.subr.bf16.mxu0 0
        %729 = vmatpush1.bf16.msra.mxu0 0
        %730 = vmatprep.subr.bf16.mxu0 0
        %731 = vmatpush1.bf16.msra.mxu0 0
        %732 = vmatprep.subr.bf16.mxu0 0
        %733 = vmatpush1.bf16.msra.mxu0 0
        %734 = vmatprep.mubr.bf16.mxu0 0
        %735 = vmatmul.mubr.bf16.gmra.mrb[0].mxu0 %v456
        %v736 = vpop.f32.mrb[0].mxu0
        %v737 = vadd.f32 %v655, %v736
        %v738 = vpop.f32.mrb[0].mxu0
        %v739 = vadd.f32 %v657, %v738
        %v740 = vpop.f32.mrb[0].mxu0
        %v741 = vpop.f32.mrb[0].mxu0
        %742 = vdwg.mxu0
        %743 = vmatprep.subr.bf16.mxu0 %v559
        %744 = vmatpush1.bf16.msra.mxu0 %v558
        %745 = vmatprep.subr.bf16.mxu0 %v563
        %746 = vmatpush1.bf16.msra.mxu0 %v562
        %747 = vmatprep.subr.bf16.mxu0 %v567
        %748 = vmatpush1.bf16.msra.mxu0 %v566
        %749 = vmatprep.subr.bf16.mxu0 %v571
        %750 = vmatpush1.bf16.msra.mxu0 %v570
        %751 = vmatprep.subr.bf16.mxu0 %v575
        %752 = vmatpush1.bf16.msra.mxu0 %v574
        %753 = vmatprep.subr.bf16.mxu0 %v579
        %754 = vmatpush1.bf16.msra.mxu0 %v578
        %755 = vmatprep.subr.bf16.mxu0 %v583
        %756 = vmatpush1.bf16.msra.mxu0 %v582
        %757 = vmatprep.subr.bf16.mxu0 %v587
        %758 = vmatpush1.bf16.msra.mxu0 %v586
        %759 = vmatprep.subr.bf16.mxu0 0
        %760 = vmatpush1.bf16.msra.mxu0 0
        %761 = vmatprep.subr.bf16.mxu0 0
        %762 = vmatpush1.bf16.msra.mxu0 0
        %763 = vmatprep.subr.bf16.mxu0 0
        %764 = vmatpush1.bf16.msra.mxu0 0
        %765 = vmatprep.subr.bf16.mxu0 0
        %766 = vmatpush1.bf16.msra.mxu0 0
        %767 = vmatprep.subr.bf16.mxu0 0
        %768 = vmatpush1.bf16.msra.mxu0 0
        %769 = vmatprep.subr.bf16.mxu0 0
        %770 = vmatpush1.bf16.msra.mxu0 0
        %771 = vmatprep.subr.bf16.mxu0 0
        %772 = vmatpush1.bf16.msra.mxu0 0
        %773 = vmatprep.subr.bf16.mxu0 0
        %774 = vmatpush1.bf16.msra.mxu0 0
        %775 = vmatprep.mubr.bf16.mxu0 0
        %776 = vmatmul.mubr.bf16.gmra.mrb[0].mxu0 %v456
        %v777 = vpop.f32.mrb[0].mxu0
        %v778 = vadd.f32 %v696, %v777
        %v779 = vpop.f32.mrb[0].mxu0
        %v780 = vadd.f32 %v698, %v779
        %v781 = vpop.f32.mrb[0].mxu0
        %v782 = vpop.f32.mrb[0].mxu0
        %783 = vdwg.mxu0
        %v816 = vunpack.c.l.b16 %v424
        %v817 = vunpack.c.h.b16 %v424
        %v818 = vunpack.c.l.b16 %v425
        %v819 = vunpack.c.h.b16 %v425
        %v820 = vunpack.c.l.b16 %v426
        %v821 = vunpack.c.h.b16 %v426
        %v822 = vunpack.c.l.b16 %v427
        %v823 = vunpack.c.h.b16 %v427
        %v824 = vunpack.c.l.b16 %v428
        %v825 = vunpack.c.h.b16 %v428
        %v826 = vunpack.c.l.b16 %v429
        %v827 = vunpack.c.h.b16 %v429
        %v828 = vunpack.c.l.b16 %v430
        %v829 = vunpack.c.h.b16 %v430
        %v830 = vunpack.c.l.b16 %v431
        %v831 = vunpack.c.h.b16 %v431
        %v832 = vunpack.c.l.b16 %v432
        %v833 = vunpack.c.h.b16 %v432
        %v834 = vunpack.c.l.b16 %v433
        %v835 = vunpack.c.h.b16 %v433
        %v836 = vunpack.c.l.b16 %v434
        %v837 = vunpack.c.h.b16 %v434
        %v838 = vunpack.c.l.b16 %v435
        %v839 = vunpack.c.h.b16 %v435
        %v840 = vunpack.c.l.b16 %v436
        %v841 = vunpack.c.h.b16 %v436
        %v842 = vunpack.c.l.b16 %v437
        %v843 = vunpack.c.h.b16 %v437
        %v844 = vunpack.c.l.b16 %v438
        %v845 = vunpack.c.h.b16 %v438
        %v846 = vunpack.c.l.b16 %v439
        %v847 = vunpack.c.h.b16 %v439
        %v848 = vunpack.c.l.b16 %v440
        %v849 = vunpack.c.h.b16 %v440
        %v850 = vunpack.c.l.b16 %v441
        %v851 = vunpack.c.h.b16 %v441
        %v852 = vunpack.c.l.b16 %v442
        %v853 = vunpack.c.h.b16 %v442
        %v854 = vunpack.c.l.b16 %v443
        %v855 = vunpack.c.h.b16 %v443
        %v856 = vunpack.c.l.b16 %v444
        %v857 = vunpack.c.h.b16 %v444
        %v858 = vunpack.c.l.b16 %v445
        %v859 = vunpack.c.h.b16 %v445
        %v860 = vunpack.c.l.b16 %v446
        %v861 = vunpack.c.h.b16 %v446
        %v862 = vunpack.c.l.b16 %v447
        %v863 = vunpack.c.h.b16 %v447
        %v864 = vunpack.c.l.b16 %v448
        %v865 = vunpack.c.h.b16 %v448
        %v866 = vunpack.c.l.b16 %v449
        %v867 = vunpack.c.h.b16 %v449
        %v868 = vunpack.c.l.b16 %v450
        %v869 = vunpack.c.h.b16 %v450
        %v870 = vunpack.c.l.b16 %v451
        %v871 = vunpack.c.h.b16 %v451
        %v872 = vunpack.c.l.b16 %v452
        %v873 = vunpack.c.h.b16 %v452
        %v874 = vunpack.c.l.b16 %v453
        %v875 = vunpack.c.h.b16 %v453
        %v876 = vunpack.c.l.b16 %v454
        %v877 = vunpack.c.h.b16 %v454
        %v878 = vunpack.c.l.b16 %v455
        %v879 = vunpack.c.h.b16 %v455
        %v880 = vpack.c.b16 %v820, %v816
        %v881 = vpack.c.b16 %v821, %v817
        %v882 = vpack.c.b16 %v822, %v818
        %v883 = vpack.c.b16 %v823, %v819
        %v884 = vpack.c.b16 %v828, %v824
        %v885 = vpack.c.b16 %v829, %v825
        %v886 = vpack.c.b16 %v830, %v826
        %v887 = vpack.c.b16 %v831, %v827
        %v888 = vpack.c.b16 %v836, %v832
        %v889 = vpack.c.b16 %v837, %v833
        %v890 = vpack.c.b16 %v838, %v834
        %v891 = vpack.c.b16 %v839, %v835
        %v892 = vpack.c.b16 %v844, %v840
        %v893 = vpack.c.b16 %v845, %v841
        %v894 = vpack.c.b16 %v846, %v842
        %v895 = vpack.c.b16 %v847, %v843
        %v896 = vpack.c.b16 %v852, %v848
        %v897 = vpack.c.b16 %v853, %v849
        %v898 = vpack.c.b16 %v854, %v850
        %v899 = vpack.c.b16 %v855, %v851
        %v900 = vpack.c.b16 %v860, %v856
        %v901 = vpack.c.b16 %v861, %v857
        %v902 = vpack.c.b16 %v862, %v858
        %v903 = vpack.c.b16 %v863, %v859
        %v904 = vpack.c.b16 %v868, %v864
        %v905 = vpack.c.b16 %v869, %v865
        %v906 = vpack.c.b16 %v870, %v866
        %v907 = vpack.c.b16 %v871, %v867
        %v908 = vpack.c.b16 %v876, %v872
        %v909 = vpack.c.b16 %v877, %v873
        %v910 = vpack.c.b16 %v878, %v874
        %v911 = vpack.c.b16 %v879, %v875
        %944 = vmatprep.subr.bf16.mxu0 %v881
        %945 = vmatpush1.bf16.msra.mxu0 %v880
        %946 = vmatprep.subr.bf16.mxu0 %v885
        %947 = vmatpush1.bf16.msra.mxu0 %v884
        %948 = vmatprep.subr.bf16.mxu0 %v889
        %949 = vmatpush1.bf16.msra.mxu0 %v888
        %950 = vmatprep.subr.bf16.mxu0 %v893
        %951 = vmatpush1.bf16.msra.mxu0 %v892
        %952 = vmatprep.subr.bf16.mxu0 %v897
        %953 = vmatpush1.bf16.msra.mxu0 %v896
        %954 = vmatprep.subr.bf16.mxu0 %v901
        %955 = vmatpush1.bf16.msra.mxu0 %v900
        %956 = vmatprep.subr.bf16.mxu0 %v905
        %957 = vmatpush1.bf16.msra.mxu0 %v904
        %958 = vmatprep.subr.bf16.mxu0 %v909
        %959 = vmatpush1.bf16.msra.mxu0 %v908
        %960 = vmatprep.subr.bf16.mxu0 0
        %961 = vmatpush1.bf16.msra.mxu0 0
        %962 = vmatprep.subr.bf16.mxu0 0
        %963 = vmatpush1.bf16.msra.mxu0 0
        %964 = vmatprep.subr.bf16.mxu0 0
        %965 = vmatpush1.bf16.msra.mxu0 0
        %966 = vmatprep.subr.bf16.mxu0 0
        %967 = vmatpush1.bf16.msra.mxu0 0
        %968 = vmatprep.subr.bf16.mxu0 0
        %969 = vmatpush1.bf16.msra.mxu0 0
        %970 = vmatprep.subr.bf16.mxu0 0
        %971 = vmatpush1.bf16.msra.mxu0 0
        %972 = vmatprep.subr.bf16.mxu0 0
        %973 = vmatpush1.bf16.msra.mxu0 0
        %974 = vmatprep.subr.bf16.mxu0 0
        %975 = vmatpush1.bf16.msra.mxu0 0
        %976 = vmatprep.mubr.bf16.mxu0 0
        %977 = vmatmul.mubr.bf16.gmra.mrb[0].mxu0 %v456
        %v978 = vpop.f32.mrb[0].mxu0
        %v979 = vadd.f32 0.0, %v978
        %v980 = vpop.f32.mrb[0].mxu0
        %v981 = vadd.f32 0.0, %v980
        %v982 = vpop.f32.mrb[0].mxu0
        %v983 = vpop.f32.mrb[0].mxu0
        %984 = vdwg.mxu0
        %985 = vmatprep.subr.bf16.mxu0 %v883
        %986 = vmatpush1.bf16.msra.mxu0 %v882
        %987 = vmatprep.subr.bf16.mxu0 %v887
        %988 = vmatpush1.bf16.msra.mxu0 %v886
        %989 = vmatprep.subr.bf16.mxu0 %v891
        %990 = vmatpush1.bf16.msra.mxu0 %v890
        %991 = vmatprep.subr.bf16.mxu0 %v895
        %992 = vmatpush1.bf16.msra.mxu0 %v894
        %993 = vmatprep.subr.bf16.mxu0 %v899
        %994 = vmatpush1.bf16.msra.mxu0 %v898
        %995 = vmatprep.subr.bf16.mxu0 %v903
        %996 = vmatpush1.bf16.msra.mxu0 %v902
        %997 = vmatprep.subr.bf16.mxu0 %v907
        %998 = vmatpush1.bf16.msra.mxu0 %v906
        %999 = vmatprep.subr.bf16.mxu0 %v911
        %1000 = vmatpush1.bf16.msra.mxu0 %v910
        %1001 = vmatprep.subr.bf16.mxu0 0
        %1002 = vmatpush1.bf16.msra.mxu0 0
        %1003 = vmatprep.subr.bf16.mxu0 0
        %1004 = vmatpush1.bf16.msra.mxu0 0
        %1005 = vmatprep.subr.bf16.mxu0 0
        %1006 = vmatpush1.bf16.msra.mxu0 0
        %1007 = vmatprep.subr.bf16.mxu0 0
        %1008 = vmatpush1.bf16.msra.mxu0 0
        %1009 = vmatprep.subr.bf16.mxu0 0
        %1010 = vmatpush1.bf16.msra.mxu0 0
        %1011 = vmatprep.subr.bf16.mxu0 0
        %1012 = vmatpush1.bf16.msra.mxu0 0
        %1013 = vmatprep.subr.bf16.mxu0 0
        %1014 = vmatpush1.bf16.msra.mxu0 0
        %1015 = vmatprep.subr.bf16.mxu0 0
        %1016 = vmatpush1.bf16.msra.mxu0 0
        %1017 = vmatprep.mubr.bf16.mxu0 0
        %1018 = vmatmul.mubr.bf16.gmra.mrb[0].mxu0 %v456
        %v1019 = vpop.f32.mrb[0].mxu0
        %v1020 = vadd.f32 0.0, %v1019
        %v1021 = vpop.f32.mrb[0].mxu0
        %v1022 = vadd.f32 0.0, %v1021
        %v1023 = vpop.f32.mrb[0].mxu0
        %v1024 = vpop.f32.mrb[0].mxu0
        %1025 = vdwg.mxu0
        %v1026 = vadd.f32 %v737, %v979
        %v1027 = vadd.f32 %v739, %v981
        %v1028 = vadd.f32 %v778, %v1020
        %v1029 = vadd.f32 %v780, %v1022
        %v1030 = vld [vmem:[%s3] sm:$0xf]
        %v1032 = vlaneseq
        %v1033 = vshrl.u32 %v1032, 7
        %v1034 = vsub.s32 0, %v1033
        %v1035 = vrot.slane %v1030, %v1034
        %v1036 = vlaneseq
        %v1037 = vshrl.u32 %v1036, 7
        %v1038 = vsub.s32 1, %v1037
        %v1039 = vrot.slane %v1030, %v1038
        %v1040 = vlaneseq
        %v1041 = vshrl.u32 %v1040, 7
        %v1042 = vsub.s32 2, %v1041
        %v1043 = vrot.slane %v1030, %v1042
        %v1044 = vlaneseq
        %v1045 = vshrl.u32 %v1044, 7
        %v1046 = vsub.s32 3, %v1045
        %v1047 = vrot.slane %v1030, %v1046
        %v1052 = vadd.f32 %v1026, %v1035
        %v1053 = vadd.f32 %v1027, %v1039
        %v1054 = vadd.f32 %v1028, %v1043
        %v1055 = vadd.f32 %v1029, %v1047
        %1056 = vst [vmem:[%s382] sm:$0xff] %v1052
        %1057 = vst [vmem:[%s382 + $0x8] sm:$0xff] %v1053
        %1058 = vst [vmem:[%s382 + $0x10] sm:$0xff] %v1054
        %1059 = vst [vmem:[%s382 + $0x18] sm:$0xff] %v1055
        %v1060 = vlaneseq
        %v1061 = vand.u32 %v1060, 127
        %v1062 = vadd.s32 %v1061, 128
        %v1063 = vadd.s32 %v1061, 256
        %v1064 = vadd.s32 %v1061, 384
        %s1065 = smul.u32 0, 4
        %s1066 = smul.addr %s1065, 8
        %s1067 = scalar_lea.vmem %s382, %s1066 [#allocation11]
        %v1068 = vld [vmem:[%s1067] sm:$0xff]
        %v1069 = vld [vmem:[%s1067 + $0x8] sm:$0xff]
        %v1070 = vld [vmem:[%s1067 + $0x10] sm:$0xff]
        %v1071 = vld [vmem:[%s1067 + $0x18] sm:$0xff]
        %v1072 = vmax.f32 %v1068, %v1069
        %v1073 = vmax.f32 %v1070, %v1071
        %v1074 = vmax.f32 %v1072, %v1073
        %1075 = vmax.xlane.f32.xlu0 %v1074
        %v1076 = vpop.xlane.xlu0 %1075
        %vm1077 = vcmp.eq.f32.partialorder %v1068, %v1076
        %vm1078 = vcmp.eq.f32.partialorder %v1069, %v1076
        %vm1079 = vcmp.eq.f32.partialorder %v1070, %v1076
        %vm1080 = vcmp.eq.f32.partialorder %v1071, %v1076
        %v1081 = vsel %vm1077, %v1061, 512
        %v1082 = vsel %vm1078, %v1062, 512
        %v1083 = vsel %vm1079, %v1063, 512
        %v1084 = vsel %vm1080, %v1064, 512
        %vm1085 = vcmp.lt.s32.totalorder %v1081, %v1082
        %v1086 = vsel %vm1085, %v1081, %v1082
        %vm1087 = vcmp.lt.s32.totalorder %v1083, %v1084
        %v1088 = vsel %vm1087, %v1083, %v1084
        %vm1089 = vcmp.lt.s32.totalorder %v1086, %v1088
        %v1090 = vsel %vm1089, %v1086, %v1088
        %v1091 = vand.u32 %v1090, 65535
        %v1092 = vshra.s32 %v1090, 16
        %v1093 = vcvt.s32.f32 %v1091
        %v1094 = vcvt.s32.f32 %v1092
        %1095 = vmin.xlane.f32.xlu0 %v1094
        %v1096 = vpop.xlane.xlu0 %1095
        %vm1097 = vcmp.eq.f32.partialorder %v1094, %v1096
        %v1098 = vsel %vm1097, %v1093, inf
        %1099 = vmin.xlane.f32.xlu0 %v1098
        %v1100 = vpop.xlane.xlu0 %1099
        %v1101 = vcvt.f32.s32 %v1100
        %v1102 = vcvt.f32.s32 %v1096
        %v1103 = vshll.u32 %v1102, 16
        %v1104 = vadd.s32 %v1103, %v1101
        %vm1105 = vcmp.eq.s32.totalorder %v1061, %v1104
        %vm1106 = vcmp.eq.s32.totalorder %v1062, %v1104
        %vm1107 = vcmp.eq.s32.totalorder %v1063, %v1104
        %vm1108 = vcmp.eq.s32.totalorder %v1064, %v1104
        %v1109 = vsel %vm1105, -3.4028235e+38, %v1068
        %v1110 = vsel %vm1106, -3.4028235e+38, %v1069
        %v1111 = vsel %vm1107, -3.4028235e+38, %v1070
        %v1112 = vsel %vm1108, -3.4028235e+38, %v1071
        %v1113 = vmax.f32 %v1109, %v1110
        %v1114 = vmax.f32 %v1111, %v1112
        %v1115 = vmax.f32 %v1113, %v1114
        %1116 = vmax.xlane.f32.xlu0 %v1115
        %v1117 = vpop.xlane.xlu0 %1116
        %vm1118 = vcmp.eq.f32.partialorder %v1109, %v1117
        %vm1119 = vcmp.eq.f32.partialorder %v1110, %v1117
        %vm1120 = vcmp.eq.f32.partialorder %v1111, %v1117
        %vm1121 = vcmp.eq.f32.partialorder %v1112, %v1117
        %v1122 = vsel %vm1118, %v1061, 512
        %v1123 = vsel %vm1119, %v1062, 512
        %v1124 = vsel %vm1120, %v1063, 512
        %v1125 = vsel %vm1121, %v1064, 512
        %vm1126 = vcmp.lt.s32.totalorder %v1122, %v1123
        %v1127 = vsel %vm1126, %v1122, %v1123
        %vm1128 = vcmp.lt.s32.totalorder %v1124, %v1125
        %v1129 = vsel %vm1128, %v1124, %v1125
        %vm1130 = vcmp.lt.s32.totalorder %v1127, %v1129
        %v1131 = vsel %vm1130, %v1127, %v1129
        %v1132 = vand.u32 %v1131, 65535
        %v1133 = vshra.s32 %v1131, 16
        %v1134 = vcvt.s32.f32 %v1132
        %v1135 = vcvt.s32.f32 %v1133
        %1136 = vmin.xlane.f32.xlu0 %v1135
        %v1137 = vpop.xlane.xlu0 %1136
        %vm1138 = vcmp.eq.f32.partialorder %v1135, %v1137
        %v1139 = vsel %vm1138, %v1134, inf
        %1140 = vmin.xlane.f32.xlu0 %v1139
        %v1141 = vpop.xlane.xlu0 %1140
        %v1142 = vcvt.f32.s32 %v1141
        %v1143 = vcvt.f32.s32 %v1137
        %v1144 = vshll.u32 %v1143, 16
        %v1145 = vadd.s32 %v1144, %v1142
        %vm1146 = vcmp.eq.s32.totalorder %v1061, %v1145
        %vm1147 = vcmp.eq.s32.totalorder %v1062, %v1145
        %vm1148 = vcmp.eq.s32.totalorder %v1063, %v1145
        %vm1149 = vcmp.eq.s32.totalorder %v1064, %v1145
        %vm1150 = vmor %vm1105, %vm1146
        %vm1151 = vmor %vm1106, %vm1147
        %vm1152 = vmor %vm1107, %vm1148
        %vm1153 = vmor %vm1108, %vm1149
        %v1154 = vsel %vm1146, -3.4028235e+38, %v1109
        %v1155 = vsel %vm1147, -3.4028235e+38, %v1110
        %v1156 = vsel %vm1148, -3.4028235e+38, %v1111
        %v1157 = vsel %vm1149, -3.4028235e+38, %v1112
        %v1158 = vmax.f32 %v1154, %v1155
        %v1159 = vmax.f32 %v1156, %v1157
        %v1160 = vmax.f32 %v1158, %v1159
        %1161 = vmax.xlane.f32.xlu0 %v1160
        %v1162 = vpop.xlane.xlu0 %1161
        %vm1163 = vcmp.eq.f32.partialorder %v1154, %v1162
        %vm1164 = vcmp.eq.f32.partialorder %v1155, %v1162
        %vm1165 = vcmp.eq.f32.partialorder %v1156, %v1162
        %vm1166 = vcmp.eq.f32.partialorder %v1157, %v1162
        %v1167 = vsel %vm1163, %v1061, 512
        %v1168 = vsel %vm1164, %v1062, 512
        %v1169 = vsel %vm1165, %v1063, 512
        %v1170 = vsel %vm1166, %v1064, 512
        %vm1171 = vcmp.lt.s32.totalorder %v1167, %v1168
        %v1172 = vsel %vm1171, %v1167, %v1168
        %vm1173 = vcmp.lt.s32.totalorder %v1169, %v1170
        %v1174 = vsel %vm1173, %v1169, %v1170
        %vm1175 = vcmp.lt.s32.totalorder %v1172, %v1174
        %v1176 = vsel %vm1175, %v1172, %v1174
        %v1177 = vand.u32 %v1176, 65535
        %v1178 = vshra.s32 %v1176, 16
        %v1179 = vcvt.s32.f32 %v1177
        %v1180 = vcvt.s32.f32 %v1178
        %1181 = vmin.xlane.f32.xlu0 %v1180
        %v1182 = vpop.xlane.xlu0 %1181
        %vm1183 = vcmp.eq.f32.partialorder %v1180, %v1182
        %v1184 = vsel %vm1183, %v1179, inf
        %1185 = vmin.xlane.f32.xlu0 %v1184
        %v1186 = vpop.xlane.xlu0 %1185
        %v1187 = vcvt.f32.s32 %v1186
        %v1188 = vcvt.f32.s32 %v1182
        %v1189 = vshll.u32 %v1188, 16
        %v1190 = vadd.s32 %v1189, %v1187
        %vm1191 = vcmp.eq.s32.totalorder %v1061, %v1190
        %vm1192 = vcmp.eq.s32.totalorder %v1062, %v1190
        %vm1193 = vcmp.eq.s32.totalorder %v1063, %v1190
        %vm1194 = vcmp.eq.s32.totalorder %v1064, %v1190
        %vm1195 = vmor %vm1150, %vm1191
        %vm1196 = vmor %vm1151, %vm1192
        %vm1197 = vmor %vm1152, %vm1193
        %vm1198 = vmor %vm1153, %vm1194
        %v1199 = vsel %vm1191, -3.4028235e+38, %v1154
        %v1200 = vsel %vm1192, -3.4028235e+38, %v1155
        %v1201 = vsel %vm1193, -3.4028235e+38, %v1156
        %v1202 = vsel %vm1194, -3.4028235e+38, %v1157
        %v1203 = vmax.f32 %v1199, %v1200
        %v1204 = vmax.f32 %v1201, %v1202
        %v1205 = vmax.f32 %v1203, %v1204
        %1206 = vmax.xlane.f32.xlu0 %v1205
        %v1207 = vpop.xlane.xlu0 %1206
        %vm1208 = vcmp.eq.f32.partialorder %v1199, %v1207
        %vm1209 = vcmp.eq.f32.partialorder %v1200, %v1207
        %vm1210 = vcmp.eq.f32.partialorder %v1201, %v1207
        %vm1211 = vcmp.eq.f32.partialorder %v1202, %v1207
        %v1212 = vsel %vm1208, %v1061, 512
        %v1213 = vsel %vm1209, %v1062, 512
        %v1214 = vsel %vm1210, %v1063, 512
        %v1215 = vsel %vm1211, %v1064, 512
        %vm1216 = vcmp.lt.s32.totalorder %v1212, %v1213
        %v1217 = vsel %vm1216, %v1212, %v1213
        %vm1218 = vcmp.lt.s32.totalorder %v1214, %v1215
        %v1219 = vsel %vm1218, %v1214, %v1215
        %vm1220 = vcmp.lt.s32.totalorder %v1217, %v1219
        %v1221 = vsel %vm1220, %v1217, %v1219
        %v1222 = vand.u32 %v1221, 65535
        %v1223 = vshra.s32 %v1221, 16
        %v1224 = vcvt.s32.f32 %v1222
        %v1225 = vcvt.s32.f32 %v1223
        %1226 = vmin.xlane.f32.xlu0 %v1225
        %v1227 = vpop.xlane.xlu0 %1226
        %vm1228 = vcmp.eq.f32.partialorder %v1225, %v1227
        %v1229 = vsel %vm1228, %v1224, inf
        %1230 = vmin.xlane.f32.xlu0 %v1229
        %v1231 = vpop.xlane.xlu0 %1230
        %v1232 = vcvt.f32.s32 %v1231
        %v1233 = vcvt.f32.s32 %v1227
        %v1234 = vshll.u32 %v1233, 16
        %v1235 = vadd.s32 %v1234, %v1232
        %vm1236 = vcmp.eq.s32.totalorder %v1061, %v1235
        %vm1237 = vcmp.eq.s32.totalorder %v1062, %v1235
        %vm1238 = vcmp.eq.s32.totalorder %v1063, %v1235
        %vm1239 = vcmp.eq.s32.totalorder %v1064, %v1235
        %vm1240 = vmor %vm1195, %vm1236
        %vm1241 = vmor %vm1196, %vm1237
        %vm1242 = vmor %vm1197, %vm1238
        %vm1243 = vmor %vm1198, %vm1239
        %v1244 = vsel %vm1236, -3.4028235e+38, %v1199
        %v1245 = vsel %vm1237, -3.4028235e+38, %v1200
        %v1246 = vsel %vm1238, -3.4028235e+38, %v1201
        %v1247 = vsel %vm1239, -3.4028235e+38, %v1202
        %v1248 = vmax.f32 %v1244, %v1245
        %v1249 = vmax.f32 %v1246, %v1247
        %v1250 = vmax.f32 %v1248, %v1249
        %1251 = vmax.xlane.f32.xlu0 %v1250
        %v1252 = vpop.xlane.xlu0 %1251
        %vm1253 = vcmp.eq.f32.partialorder %v1244, %v1252
        %vm1254 = vcmp.eq.f32.partialorder %v1245, %v1252
        %vm1255 = vcmp.eq.f32.partialorder %v1246, %v1252
        %vm1256 = vcmp.eq.f32.partialorder %v1247, %v1252
        %v1257 = vsel %vm1253, %v1061, 512
        %v1258 = vsel %vm1254, %v1062, 512
        %v1259 = vsel %vm1255, %v1063, 512
        %v1260 = vsel %vm1256, %v1064, 512
        %vm1261 = vcmp.lt.s32.totalorder %v1257, %v1258
        %v1262 = vsel %vm1261, %v1257, %v1258
        %vm1263 = vcmp.lt.s32.totalorder %v1259, %v1260
        %v1264 = vsel %vm1263, %v1259, %v1260
        %vm1265 = vcmp.lt.s32.totalorder %v1262, %v1264
        %v1266 = vsel %vm1265, %v1262, %v1264
        %v1267 = vand.u32 %v1266, 65535
        %v1268 = vshra.s32 %v1266, 16
        %v1269 = vcvt.s32.f32 %v1267
        %v1270 = vcvt.s32.f32 %v1268
        %1271 = vmin.xlane.f32.xlu0 %v1270
        %v1272 = vpop.xlane.xlu0 %1271
        %vm1273 = vcmp.eq.f32.partialorder %v1270, %v1272
        %v1274 = vsel %vm1273, %v1269, inf
        %1275 = vmin.xlane.f32.xlu0 %v1274
        %v1276 = vpop.xlane.xlu0 %1275
        %v1277 = vcvt.f32.s32 %v1276
        %v1278 = vcvt.f32.s32 %v1272
        %v1279 = vshll.u32 %v1278, 16
        %v1280 = vadd.s32 %v1279, %v1277
        %vm1281 = vcmp.eq.s32.totalorder %v1061, %v1280
        %vm1282 = vcmp.eq.s32.totalorder %v1062, %v1280
        %vm1283 = vcmp.eq.s32.totalorder %v1063, %v1280
        %vm1284 = vcmp.eq.s32.totalorder %v1064, %v1280
        %vm1285 = vmor %vm1240, %vm1281
        %vm1286 = vmor %vm1241, %vm1282
        %vm1287 = vmor %vm1242, %vm1283
        %vm1288 = vmor %vm1243, %vm1284
        %v1289 = vsel %vm1281, -3.4028235e+38, %v1244
        %v1290 = vsel %vm1282, -3.4028235e+38, %v1245
        %v1291 = vsel %vm1283, -3.4028235e+38, %v1246
        %v1292 = vsel %vm1284, -3.4028235e+38, %v1247
        %v1293 = vmax.f32 %v1289, %v1290
        %v1294 = vmax.f32 %v1291, %v1292
        %v1295 = vmax.f32 %v1293, %v1294
        %1296 = vmax.xlane.f32.xlu0 %v1295
        %v1297 = vpop.xlane.xlu0 %1296
        %vm1298 = vcmp.eq.f32.partialorder %v1289, %v1297
        %vm1299 = vcmp.eq.f32.partialorder %v1290, %v1297
        %vm1300 = vcmp.eq.f32.partialorder %v1291, %v1297
        %vm1301 = vcmp.eq.f32.partialorder %v1292, %v1297
        %v1302 = vsel %vm1298, %v1061, 512
        %v1303 = vsel %vm1299, %v1062, 512
        %v1304 = vsel %vm1300, %v1063, 512
        %v1305 = vsel %vm1301, %v1064, 512
        %vm1306 = vcmp.lt.s32.totalorder %v1302, %v1303
        %v1307 = vsel %vm1306, %v1302, %v1303
        %vm1308 = vcmp.lt.s32.totalorder %v1304, %v1305
        %v1309 = vsel %vm1308, %v1304, %v1305
        %vm1310 = vcmp.lt.s32.totalorder %v1307, %v1309
        %v1311 = vsel %vm1310, %v1307, %v1309
        %v1312 = vand.u32 %v1311, 65535
        %v1313 = vshra.s32 %v1311, 16
        %v1314 = vcvt.s32.f32 %v1312
        %v1315 = vcvt.s32.f32 %v1313
        %1316 = vmin.xlane.f32.xlu0 %v1315
        %v1317 = vpop.xlane.xlu0 %1316
        %vm1318 = vcmp.eq.f32.partialorder %v1315, %v1317
        %v1319 = vsel %vm1318, %v1314, inf
        %1320 = vmin.xlane.f32.xlu0 %v1319
        %v1321 = vpop.xlane.xlu0 %1320
        %v1322 = vcvt.f32.s32 %v1321
        %v1323 = vcvt.f32.s32 %v1317
        %v1324 = vshll.u32 %v1323, 16
        %v1325 = vadd.s32 %v1324, %v1322
        %vm1326 = vcmp.eq.s32.totalorder %v1061, %v1325
        %vm1327 = vcmp.eq.s32.totalorder %v1062, %v1325
        %vm1328 = vcmp.eq.s32.totalorder %v1063, %v1325
        %vm1329 = vcmp.eq.s32.totalorder %v1064, %v1325
        %vm1330 = vmor %vm1285, %vm1326
        %vm1331 = vmor %vm1286, %vm1327
        %vm1332 = vmor %vm1287, %vm1328
        %vm1333 = vmor %vm1288, %vm1329
        %v1334 = vsel %vm1326, -3.4028235e+38, %v1289
        %v1335 = vsel %vm1327, -3.4028235e+38, %v1290
        %v1336 = vsel %vm1328, -3.4028235e+38, %v1291
        %v1337 = vsel %vm1329, -3.4028235e+38, %v1292
        %v1338 = vmax.f32 %v1334, %v1335
        %v1339 = vmax.f32 %v1336, %v1337
        %v1340 = vmax.f32 %v1338, %v1339
        %1341 = vmax.xlane.f32.xlu0 %v1340
        %v1342 = vpop.xlane.xlu0 %1341
        %vm1343 = vcmp.eq.f32.partialorder %v1334, %v1342
        %vm1344 = vcmp.eq.f32.partialorder %v1335, %v1342
        %vm1345 = vcmp.eq.f32.partialorder %v1336, %v1342
        %vm1346 = vcmp.eq.f32.partialorder %v1337, %v1342
        %v1347 = vsel %vm1343, %v1061, 512
        %v1348 = vsel %vm1344, %v1062, 512
        %v1349 = vsel %vm1345, %v1063, 512
        %v1350 = vsel %vm1346, %v1064, 512
        %vm1351 = vcmp.lt.s32.totalorder %v1347, %v1348
        %v1352 = vsel %vm1351, %v1347, %v1348
        %vm1353 = vcmp.lt.s32.totalorder %v1349, %v1350
        %v1354 = vsel %vm1353, %v1349, %v1350
        %vm1355 = vcmp.lt.s32.totalorder %v1352, %v1354
        %v1356 = vsel %vm1355, %v1352, %v1354
        %v1357 = vand.u32 %v1356, 65535
        %v1358 = vshra.s32 %v1356, 16
        %v1359 = vcvt.s32.f32 %v1357
        %v1360 = vcvt.s32.f32 %v1358
        %1361 = vmin.xlane.f32.xlu0 %v1360
        %v1362 = vpop.xlane.xlu0 %1361
        %vm1363 = vcmp.eq.f32.partialorder %v1360, %v1362
        %v1364 = vsel %vm1363, %v1359, inf
        %1365 = vmin.xlane.f32.xlu0 %v1364
        %v1366 = vpop.xlane.xlu0 %1365
        %v1367 = vcvt.f32.s32 %v1366
        %v1368 = vcvt.f32.s32 %v1362
        %v1369 = vshll.u32 %v1368, 16
        %v1370 = vadd.s32 %v1369, %v1367
        %vm1371 = vcmp.eq.s32.totalorder %v1061, %v1370
        %vm1372 = vcmp.eq.s32.totalorder %v1062, %v1370
        %vm1373 = vcmp.eq.s32.totalorder %v1063, %v1370
        %vm1374 = vcmp.eq.s32.totalorder %v1064, %v1370
        %vm1375 = vmor %vm1330, %vm1371
        %vm1376 = vmor %vm1331, %vm1372
        %vm1377 = vmor %vm1332, %vm1373
        %vm1378 = vmor %vm1333, %vm1374
        %v1379 = vsel %vm1371, -3.4028235e+38, %v1334
        %v1380 = vsel %vm1372, -3.4028235e+38, %v1335
        %v1381 = vsel %vm1373, -3.4028235e+38, %v1336
        %v1382 = vsel %vm1374, -3.4028235e+38, %v1337
        %v1383 = vmax.f32 %v1379, %v1380
        %v1384 = vmax.f32 %v1381, %v1382
        %v1385 = vmax.f32 %v1383, %v1384
        %1386 = vmax.xlane.f32.xlu0 %v1385
        %v1387 = vpop.xlane.xlu0 %1386
        %vm1388 = vcmp.eq.f32.partialorder %v1379, %v1387
        %vm1389 = vcmp.eq.f32.partialorder %v1380, %v1387
        %vm1390 = vcmp.eq.f32.partialorder %v1381, %v1387
        %vm1391 = vcmp.eq.f32.partialorder %v1382, %v1387
        %v1392 = vsel %vm1388, %v1061, 512
        %v1393 = vsel %vm1389, %v1062, 512
        %v1394 = vsel %vm1390, %v1063, 512
        %v1395 = vsel %vm1391, %v1064, 512
        %vm1396 = vcmp.lt.s32.totalorder %v1392, %v1393
        %v1397 = vsel %vm1396, %v1392, %v1393
        %vm1398 = vcmp.lt.s32.totalorder %v1394, %v1395
        %v1399 = vsel %vm1398, %v1394, %v1395
        %vm1400 = vcmp.lt.s32.totalorder %v1397, %v1399
        %v1401 = vsel %vm1400, %v1397, %v1399
        %v1402 = vand.u32 %v1401, 65535
        %v1403 = vshra.s32 %v1401, 16
        %v1404 = vcvt.s32.f32 %v1402
        %v1405 = vcvt.s32.f32 %v1403
        %1406 = vmin.xlane.f32.xlu0 %v1405
        %v1407 = vpop.xlane.xlu0 %1406
        %vm1408 = vcmp.eq.f32.partialorder %v1405, %v1407
        %v1409 = vsel %vm1408, %v1404, inf
        %1410 = vmin.xlane.f32.xlu0 %v1409
        %v1411 = vpop.xlane.xlu0 %1410
        %v1412 = vcvt.f32.s32 %v1411
        %v1413 = vcvt.f32.s32 %v1407
        %v1414 = vshll.u32 %v1413, 16
        %v1415 = vadd.s32 %v1414, %v1412
        %vm1416 = vcmp.eq.s32.totalorder %v1061, %v1415
        %vm1417 = vcmp.eq.s32.totalorder %v1062, %v1415
        %vm1418 = vcmp.eq.s32.totalorder %v1063, %v1415
        %vm1419 = vcmp.eq.s32.totalorder %v1064, %v1415
        %vm1420 = vmor %vm1375, %vm1416
        %vm1421 = vmor %vm1376, %vm1417
        %vm1422 = vmor %vm1377, %vm1418
        %vm1423 = vmor %vm1378, %vm1419
        %v1424 = vsel %vm1416, -3.4028235e+38, %v1379
        %v1425 = vsel %vm1417, -3.4028235e+38, %v1380
        %v1426 = vsel %vm1418, -3.4028235e+38, %v1381
        %v1427 = vsel %vm1419, -3.4028235e+38, %v1382
        %v1428 = vmax.f32 %v1424, %v1425
        %v1429 = vmax.f32 %v1426, %v1427
        %v1430 = vmax.f32 %v1428, %v1429
        %1431 = vmax.xlane.f32.xlu0 %v1430
        %v1432 = vpop.xlane.xlu0 %1431
        %vm1433 = vcmp.eq.f32.partialorder %v1424, %v1432
        %vm1434 = vcmp.eq.f32.partialorder %v1425, %v1432
        %vm1435 = vcmp.eq.f32.partialorder %v1426, %v1432
        %vm1436 = vcmp.eq.f32.partialorder %v1427, %v1432
        %v1437 = vsel %vm1433, %v1061, 512
        %v1438 = vsel %vm1434, %v1062, 512
        %v1439 = vsel %vm1435, %v1063, 512
        %v1440 = vsel %vm1436, %v1064, 512
        %vm1441 = vcmp.lt.s32.totalorder %v1437, %v1438
        %v1442 = vsel %vm1441, %v1437, %v1438
        %vm1443 = vcmp.lt.s32.totalorder %v1439, %v1440
        %v1444 = vsel %vm1443, %v1439, %v1440
        %vm1445 = vcmp.lt.s32.totalorder %v1442, %v1444
        %v1446 = vsel %vm1445, %v1442, %v1444
        %v1447 = vand.u32 %v1446, 65535
        %v1448 = vshra.s32 %v1446, 16
        %v1449 = vcvt.s32.f32 %v1447
        %v1450 = vcvt.s32.f32 %v1448
        %1451 = vmin.xlane.f32.xlu0 %v1450
        %v1452 = vpop.xlane.xlu0 %1451
        %vm1453 = vcmp.eq.f32.partialorder %v1450, %v1452
        %v1454 = vsel %vm1453, %v1449, inf
        %1455 = vmin.xlane.f32.xlu0 %v1454
        %v1456 = vpop.xlane.xlu0 %1455
        %v1457 = vcvt.f32.s32 %v1456
        %v1458 = vcvt.f32.s32 %v1452
        %v1459 = vshll.u32 %v1458, 16
        %v1460 = vadd.s32 %v1459, %v1457
        %vm1461 = vcmp.eq.s32.totalorder %v1061, %v1460
        %vm1462 = vcmp.eq.s32.totalorder %v1062, %v1460
        %vm1463 = vcmp.eq.s32.totalorder %v1063, %v1460
        %vm1464 = vcmp.eq.s32.totalorder %v1064, %v1460
        %vm1465 = vmor %vm1420, %vm1461
        %vm1466 = vmor %vm1421, %vm1462
        %vm1467 = vmor %vm1422, %vm1463
        %vm1468 = vmor %vm1423, %vm1464
        %v1469 = vsel %vm1461, -3.4028235e+38, %v1424
        %v1470 = vsel %vm1462, -3.4028235e+38, %v1425
        %v1471 = vsel %vm1463, -3.4028235e+38, %v1426
        %v1472 = vsel %vm1464, -3.4028235e+38, %v1427
        %v1473 = vmax.f32 %v1469, %v1470
        %v1474 = vmax.f32 %v1471, %v1472
        %v1475 = vmax.f32 %v1473, %v1474
        %1476 = vmax.xlane.f32.xlu0 %v1475
        %v1477 = vpop.xlane.xlu0 %1476
        %vm1478 = vcmp.eq.f32.partialorder %v1469, %v1477
        %vm1479 = vcmp.eq.f32.partialorder %v1470, %v1477
        %vm1480 = vcmp.eq.f32.partialorder %v1471, %v1477
        %vm1481 = vcmp.eq.f32.partialorder %v1472, %v1477
        %v1482 = vsel %vm1478, %v1061, 512
        %v1483 = vsel %vm1479, %v1062, 512
        %v1484 = vsel %vm1480, %v1063, 512
        %v1485 = vsel %vm1481, %v1064, 512
        %vm1486 = vcmp.lt.s32.totalorder %v1482, %v1483
        %v1487 = vsel %vm1486, %v1482, %v1483
        %vm1488 = vcmp.lt.s32.totalorder %v1484, %v1485
        %v1489 = vsel %vm1488, %v1484, %v1485
        %vm1490 = vcmp.lt.s32.totalorder %v1487, %v1489
        %v1491 = vsel %vm1490, %v1487, %v1489
        %v1492 = vand.u32 %v1491, 65535
        %v1493 = vshra.s32 %v1491, 16
        %v1494 = vcvt.s32.f32 %v1492
        %v1495 = vcvt.s32.f32 %v1493
        %1496 = vmin.xlane.f32.xlu0 %v1495
        %v1497 = vpop.xlane.xlu0 %1496
        %vm1498 = vcmp.eq.f32.partialorder %v1495, %v1497
        %v1499 = vsel %vm1498, %v1494, inf
        %1500 = vmin.xlane.f32.xlu0 %v1499
        %v1501 = vpop.xlane.xlu0 %1500
        %v1502 = vcvt.f32.s32 %v1501
        %v1503 = vcvt.f32.s32 %v1497
        %v1504 = vshll.u32 %v1503, 16
        %v1505 = vadd.s32 %v1504, %v1502
        %vm1506 = vcmp.eq.s32.totalorder %v1061, %v1505
        %vm1507 = vcmp.eq.s32.totalorder %v1062, %v1505
        %vm1508 = vcmp.eq.s32.totalorder %v1063, %v1505
        %vm1509 = vcmp.eq.s32.totalorder %v1064, %v1505
        %vm1510 = vmor %vm1465, %vm1506
        %vm1511 = vmor %vm1466, %vm1507
        %vm1512 = vmor %vm1467, %vm1508
        %vm1513 = vmor %vm1468, %vm1509
        %v1514 = vsel %vm1510, %v1068, 0.0
        %v1515 = vsel %vm1511, %v1069, 0.0
        %v1516 = vsel %vm1512, %v1070, 0.0
        %v1517 = vsel %vm1513, %v1071, 0.0
        %1518 = vst [vmem:[%s1067] sm:$0xff] %v1514
        %1519 = vst [vmem:[%s1067 + $0x8] sm:$0xff] %v1515
        %1520 = vst [vmem:[%s1067 + $0x10] sm:$0xff] %v1516
        %1521 = vst [vmem:[%s1067 + $0x18] sm:$0xff] %v1517
        %v1522 = vld [vmem:[%s382] sm:$0xff]
        %v1523 = vld [vmem:[%s382 + $0x8] sm:$0xff]
        %v1524 = vld [vmem:[%s382 + $0x10] sm:$0xff]
        %v1525 = vld [vmem:[%s382 + $0x18] sm:$0xff]
        %v1526 = vld [vmem:[#allocation8] sm:$0xf]
        %v1527 = vld [vmem:[#allocation8 + $0x4] sm:$0xf]
        %v1528 = vld [vmem:[#allocation8 + $0x8] sm:$0xf]
        %v1529 = vld [vmem:[#allocation8 + $0xc] sm:$0xf]
        %v1530 = vld [vmem:[#allocation8 + $0x10] sm:$0xf]
        %v1531 = vld [vmem:[#allocation8 + $0x14] sm:$0xf]
        %v1532 = vld [vmem:[#allocation8 + $0x18] sm:$0xf]
        %v1533 = vld [vmem:[#allocation8 + $0x1c] sm:$0xf]
        %v1534 = vld [vmem:[#allocation8 + $0x20] sm:$0xf]
        %v1535 = vld [vmem:[#allocation8 + $0x24] sm:$0xf]
        %v1536 = vld [vmem:[#allocation8 + $0x28] sm:$0xf]
        %v1537 = vld [vmem:[#allocation8 + $0x2c] sm:$0xf]
        %v1538 = vld [vmem:[#allocation8 + $0x30] sm:$0xf]
        %v1539 = vld [vmem:[#allocation8 + $0x34] sm:$0xf]
        %v1540 = vld [vmem:[#allocation8 + $0x38] sm:$0xf]
        %v1541 = vld [vmem:[#allocation8 + $0x3c] sm:$0xf]
        %v1542 = vld [vmem:[#allocation8 + $0x40] sm:$0xf]
        %v1543 = vld [vmem:[#allocation8 + $0x44] sm:$0xf]
        %v1544 = vld [vmem:[#allocation8 + $0x48] sm:$0xf]
        %v1545 = vld [vmem:[#allocation8 + $0x4c] sm:$0xf]
        %v1546 = vld [vmem:[#allocation8 + $0x50] sm:$0xf]
        %v1547 = vld [vmem:[#allocation8 + $0x54] sm:$0xf]
        %v1548 = vld [vmem:[#allocation8 + $0x58] sm:$0xf]
        %v1549 = vld [vmem:[#allocation8 + $0x5c] sm:$0xf]
        %v1550 = vld [vmem:[#allocation8 + $0x60] sm:$0xf]
        %v1551 = vld [vmem:[#allocation8 + $0x64] sm:$0xf]
        %v1552 = vld [vmem:[#allocation8 + $0x68] sm:$0xf]
        %v1553 = vld [vmem:[#allocation8 + $0x6c] sm:$0xf]
        %v1554 = vld [vmem:[#allocation8 + $0x70] sm:$0xf]
        %v1555 = vld [vmem:[#allocation8 + $0x74] sm:$0xf]
        %v1556 = vld [vmem:[#allocation8 + $0x78] sm:$0xf]
        %v1557 = vld [vmem:[#allocation8 + $0x7c] sm:$0xf]
        %v1558 = vld [vmem:[#allocation8 + $0x80] sm:$0xf]
        %v1559 = vld [vmem:[#allocation8 + $0x84] sm:$0xf]
        %v1560 = vld [vmem:[#allocation8 + $0x88] sm:$0xf]
        %v1561 = vld [vmem:[#allocation8 + $0x8c] sm:$0xf]
        %v1562 = vld [vmem:[#allocation8 + $0x90] sm:$0xf]
        %v1563 = vld [vmem:[#allocation8 + $0x94] sm:$0xf]
        %v1564 = vld [vmem:[#allocation8 + $0x98] sm:$0xf]
        %v1565 = vld [vmem:[#allocation8 + $0x9c] sm:$0xf]
        %v1566 = vld [vmem:[#allocation8 + $0xa0] sm:$0xf]
        %v1567 = vld [vmem:[#allocation8 + $0xa4] sm:$0xf]
        %v1568 = vld [vmem:[#allocation8 + $0xa8] sm:$0xf]
        %v1569 = vld [vmem:[#allocation8 + $0xac] sm:$0xf]
        %v1570 = vld [vmem:[#allocation8 + $0xb0] sm:$0xf]
        %v1571 = vld [vmem:[#allocation8 + $0xb4] sm:$0xf]
        %v1572 = vld [vmem:[#allocation8 + $0xb8] sm:$0xf]
        %v1573 = vld [vmem:[#allocation8 + $0xbc] sm:$0xf]
        %v1574 = vld [vmem:[#allocation8 + $0xc0] sm:$0xf]
        %v1575 = vld [vmem:[#allocation8 + $0xc4] sm:$0xf]
        %v1576 = vld [vmem:[#allocation8 + $0xc8] sm:$0xf]
        %v1577 = vld [vmem:[#allocation8 + $0xcc] sm:$0xf]
        %v1578 = vld [vmem:[#allocation8 + $0xd0] sm:$0xf]
        %v1579 = vld [vmem:[#allocation8 + $0xd4] sm:$0xf]
        %v1580 = vld [vmem:[#allocation8 + $0xd8] sm:$0xf]
        %v1581 = vld [vmem:[#allocation8 + $0xdc] sm:$0xf]
        %v1582 = vld [vmem:[#allocation8 + $0xe0] sm:$0xf]
        %v1583 = vld [vmem:[#allocation8 + $0xe4] sm:$0xf]
        %v1584 = vld [vmem:[#allocation8 + $0xe8] sm:$0xf]
        %v1585 = vld [vmem:[#allocation8 + $0xec] sm:$0xf]
        %v1586 = vld [vmem:[#allocation8 + $0xf0] sm:$0xf]
        %v1587 = vld [vmem:[#allocation8 + $0xf4] sm:$0xf]
        %v1588 = vld [vmem:[#allocation8 + $0xf8] sm:$0xf]
        %v1589 = vld [vmem:[#allocation8 + $0xfc] sm:$0xf]
        %v1590 = vld [vmem:[#allocation10] sm:$0xf]
        %v1591 = vld [vmem:[#allocation10 + $0x4] sm:$0xf]
        %v1592 = vld [vmem:[#allocation10 + $0x8] sm:$0xf]
        %v1593 = vld [vmem:[#allocation10 + $0xc] sm:$0xf]
        %v1594 = vld [vmem:[#allocation10 + $0x10] sm:$0xf]
        %v1595 = vld [vmem:[#allocation10 + $0x14] sm:$0xf]
        %v1596 = vld [vmem:[#allocation10 + $0x18] sm:$0xf]
        %v1597 = vld [vmem:[#allocation10 + $0x1c] sm:$0xf]
        %v1598 = vld [vmem:[#allocation10 + $0x20] sm:$0xf]
        %v1599 = vld [vmem:[#allocation10 + $0x24] sm:$0xf]
        %v1600 = vld [vmem:[#allocation10 + $0x28] sm:$0xf]
        %v1601 = vld [vmem:[#allocation10 + $0x2c] sm:$0xf]
        %v1602 = vld [vmem:[#allocation10 + $0x30] sm:$0xf]
        %v1603 = vld [vmem:[#allocation10 + $0x34] sm:$0xf]
        %v1604 = vld [vmem:[#allocation10 + $0x38] sm:$0xf]
        %v1605 = vld [vmem:[#allocation10 + $0x3c] sm:$0xf]
        %v1606 = vld [vmem:[#allocation10 + $0x40] sm:$0xf]
        %v1607 = vld [vmem:[#allocation10 + $0x44] sm:$0xf]
        %v1608 = vld [vmem:[#allocation10 + $0x48] sm:$0xf]
        %v1609 = vld [vmem:[#allocation10 + $0x4c] sm:$0xf]
        %v1610 = vld [vmem:[#allocation10 + $0x50] sm:$0xf]
        %v1611 = vld [vmem:[#allocation10 + $0x54] sm:$0xf]
        %v1612 = vld [vmem:[#allocation10 + $0x58] sm:$0xf]
        %v1613 = vld [vmem:[#allocation10 + $0x5c] sm:$0xf]
        %v1614 = vld [vmem:[#allocation10 + $0x60] sm:$0xf]
        %v1615 = vld [vmem:[#allocation10 + $0x64] sm:$0xf]
        %v1616 = vld [vmem:[#allocation10 + $0x68] sm:$0xf]
        %v1617 = vld [vmem:[#allocation10 + $0x6c] sm:$0xf]
        %v1618 = vld [vmem:[#allocation10 + $0x70] sm:$0xf]
        %v1619 = vld [vmem:[#allocation10 + $0x74] sm:$0xf]
        %v1620 = vld [vmem:[#allocation10 + $0x78] sm:$0xf]
        %v1621 = vld [vmem:[#allocation10 + $0x7c] sm:$0xf]
        %v1622 = vld [vmem:[#allocation10 + $0x80] sm:$0xf]
        %v1623 = vld [vmem:[#allocation10 + $0x84] sm:$0xf]
        %v1624 = vld [vmem:[#allocation10 + $0x88] sm:$0xf]
        %v1625 = vld [vmem:[#allocation10 + $0x8c] sm:$0xf]
        %v1626 = vld [vmem:[#allocation10 + $0x90] sm:$0xf]
        %v1627 = vld [vmem:[#allocation10 + $0x94] sm:$0xf]
        %v1628 = vld [vmem:[#allocation10 + $0x98] sm:$0xf]
        %v1629 = vld [vmem:[#allocation10 + $0x9c] sm:$0xf]
        %v1630 = vld [vmem:[#allocation10 + $0xa0] sm:$0xf]
        %v1631 = vld [vmem:[#allocation10 + $0xa4] sm:$0xf]
        %v1632 = vld [vmem:[#allocation10 + $0xa8] sm:$0xf]
        %v1633 = vld [vmem:[#allocation10 + $0xac] sm:$0xf]
        %v1634 = vld [vmem:[#allocation10 + $0xb0] sm:$0xf]
        %v1635 = vld [vmem:[#allocation10 + $0xb4] sm:$0xf]
        %v1636 = vld [vmem:[#allocation10 + $0xb8] sm:$0xf]
        %v1637 = vld [vmem:[#allocation10 + $0xbc] sm:$0xf]
        %v1638 = vld [vmem:[#allocation10 + $0xc0] sm:$0xf]
        %v1639 = vld [vmem:[#allocation10 + $0xc4] sm:$0xf]
        %v1640 = vld [vmem:[#allocation10 + $0xc8] sm:$0xf]
        %v1641 = vld [vmem:[#allocation10 + $0xcc] sm:$0xf]
        %v1642 = vld [vmem:[#allocation10 + $0xd0] sm:$0xf]
        %v1643 = vld [vmem:[#allocation10 + $0xd4] sm:$0xf]
        %v1644 = vld [vmem:[#allocation10 + $0xd8] sm:$0xf]
        %v1645 = vld [vmem:[#allocation10 + $0xdc] sm:$0xf]
        %v1646 = vld [vmem:[#allocation10 + $0xe0] sm:$0xf]
        %v1647 = vld [vmem:[#allocation10 + $0xe4] sm:$0xf]
        %v1648 = vld [vmem:[#allocation10 + $0xe8] sm:$0xf]
        %v1649 = vld [vmem:[#allocation10 + $0xec] sm:$0xf]
        %v1650 = vld [vmem:[#allocation10 + $0xf0] sm:$0xf]
        %v1651 = vld [vmem:[#allocation10 + $0xf4] sm:$0xf]
        %v1652 = vld [vmem:[#allocation10 + $0xf8] sm:$0xf]
        %v1653 = vld [vmem:[#allocation10 + $0xfc] sm:$0xf]
        %v1654 = vpack.c.bf16 %v1522, %v1522
        %v1655 = vpack.c.bf16 %v1523, %v1523
        %v1656 = vpack.c.bf16 %v1524, %v1524
        %v1657 = vpack.c.bf16 %v1525, %v1525
        %v1658 = vunpack.c.l.bf16 %v1654
        %v1659 = vunpack.c.l.bf16 %v1655
        %v1660 = vunpack.c.l.bf16 %v1656
        %v1661 = vunpack.c.l.bf16 %v1657
        %v1662 = vsub.f32 %v1522, %v1658
        %v1663 = vsub.f32 %v1523, %v1659
        %v1664 = vsub.f32 %v1524, %v1660
        %v1665 = vsub.f32 %v1525, %v1661
        %v1666 = vpack.c.bf16 %v1662, %v1662
        %v1667 = vpack.c.bf16 %v1663, %v1663
        %v1668 = vpack.c.bf16 %v1664, %v1664
        %v1669 = vpack.c.bf16 %v1665, %v1665
        %v1734 = vunpack.c.l.b16 %v1526
        %v1735 = vunpack.c.l.b16 %v1527
        %v1736 = vunpack.c.l.b16 %v1528
        %v1737 = vunpack.c.l.b16 %v1529
        %v1738 = vunpack.c.l.b16 %v1530
        %v1739 = vunpack.c.l.b16 %v1531
        %v1740 = vunpack.c.l.b16 %v1532
        %v1741 = vunpack.c.l.b16 %v1533
        %v1742 = vunpack.c.l.b16 %v1534
        %v1743 = vunpack.c.l.b16 %v1535
        %v1744 = vunpack.c.l.b16 %v1536
        %v1745 = vunpack.c.l.b16 %v1537
        %v1746 = vunpack.c.l.b16 %v1538
        %v1747 = vunpack.c.l.b16 %v1539
        %v1748 = vunpack.c.l.b16 %v1540
        %v1749 = vunpack.c.l.b16 %v1541
        %v1750 = vunpack.c.l.b16 %v1542
        %v1751 = vunpack.c.l.b16 %v1543
        %v1752 = vunpack.c.l.b16 %v1544
        %v1753 = vunpack.c.l.b16 %v1545
        %v1754 = vunpack.c.l.b16 %v1546
        %v1755 = vunpack.c.l.b16 %v1547
        %v1756 = vunpack.c.l.b16 %v1548
        %v1757 = vunpack.c.l.b16 %v1549
        %v1758 = vunpack.c.l.b16 %v1550
        %v1759 = vunpack.c.l.b16 %v1551
        %v1760 = vunpack.c.l.b16 %v1552
        %v1761 = vunpack.c.l.b16 %v1553
        %v1762 = vunpack.c.l.b16 %v1554
        %v1763 = vunpack.c.l.b16 %v1555
        %v1764 = vunpack.c.l.b16 %v1556
        %v1765 = vunpack.c.l.b16 %v1557
        %v1766 = vunpack.c.l.b16 %v1558
        %v1767 = vunpack.c.l.b16 %v1559
        %v1768 = vunpack.c.l.b16 %v1560
        %v1769 = vunpack.c.l.b16 %v1561
        %v1770 = vunpack.c.l.b16 %v1562
        %v1771 = vunpack.c.l.b16 %v1563
        %v1772 = vunpack.c.l.b16 %v1564
        %v1773 = vunpack.c.l.b16 %v1565
        %v1774 = vunpack.c.l.b16 %v1566
        %v1775 = vunpack.c.l.b16 %v1567
        %v1776 = vunpack.c.l.b16 %v1568
        %v1777 = vunpack.c.l.b16 %v1569
        %v1778 = vunpack.c.l.b16 %v1570
        %v1779 = vunpack.c.l.b16 %v1571
        %v1780 = vunpack.c.l.b16 %v1572
        %v1781 = vunpack.c.l.b16 %v1573
        %v1782 = vunpack.c.l.b16 %v1574
        %v1783 = vunpack.c.l.b16 %v1575
        %v1784 = vunpack.c.l.b16 %v1576
        %v1785 = vunpack.c.l.b16 %v1577
        %v1786 = vunpack.c.l.b16 %v1578
        %v1787 = vunpack.c.l.b16 %v1579
        %v1788 = vunpack.c.l.b16 %v1580
        %v1789 = vunpack.c.l.b16 %v1581
        %v1790 = vunpack.c.l.b16 %v1582
        %v1791 = vunpack.c.l.b16 %v1583
        %v1792 = vunpack.c.l.b16 %v1584
        %v1793 = vunpack.c.l.b16 %v1585
        %v1794 = vunpack.c.l.b16 %v1586
        %v1795 = vunpack.c.l.b16 %v1587
        %v1796 = vunpack.c.l.b16 %v1588
        %v1797 = vunpack.c.l.b16 %v1589
        %v1798 = vpack.c.b16 %v1735, %v1734
        %v1799 = vpack.c.b16 %v1737, %v1736
        %v1800 = vpack.c.b16 %v1739, %v1738
        %v1801 = vpack.c.b16 %v1741, %v1740
        %v1802 = vpack.c.b16 %v1743, %v1742
        %v1803 = vpack.c.b16 %v1745, %v1744
        %v1804 = vpack.c.b16 %v1747, %v1746
        %v1805 = vpack.c.b16 %v1749, %v1748
        %v1806 = vpack.c.b16 %v1751, %v1750
        %v1807 = vpack.c.b16 %v1753, %v1752
        %v1808 = vpack.c.b16 %v1755, %v1754
        %v1809 = vpack.c.b16 %v1757, %v1756
        %v1810 = vpack.c.b16 %v1759, %v1758
        %v1811 = vpack.c.b16 %v1761, %v1760
        %v1812 = vpack.c.b16 %v1763, %v1762
        %v1813 = vpack.c.b16 %v1765, %v1764
        %v1814 = vpack.c.b16 %v1767, %v1766
        %v1815 = vpack.c.b16 %v1769, %v1768
        %v1816 = vpack.c.b16 %v1771, %v1770
        %v1817 = vpack.c.b16 %v1773, %v1772
        %v1818 = vpack.c.b16 %v1775, %v1774
        %v1819 = vpack.c.b16 %v1777, %v1776
        %v1820 = vpack.c.b16 %v1779, %v1778
        %v1821 = vpack.c.b16 %v1781, %v1780
        %v1822 = vpack.c.b16 %v1783, %v1782
        %v1823 = vpack.c.b16 %v1785, %v1784
        %v1824 = vpack.c.b16 %v1787, %v1786
        %v1825 = vpack.c.b16 %v1789, %v1788
        %v1826 = vpack.c.b16 %v1791, %v1790
        %v1827 = vpack.c.b16 %v1793, %v1792
        %v1828 = vpack.c.b16 %v1795, %v1794
        %v1829 = vpack.c.b16 %v1797, %v1796
        %1862 = vmatprep.subr.bf16.mxu0 0
        %1863 = vmatpush1.bf16.msra.mxu0 %v1798
        %1864 = vmatprep.subr.bf16.mxu0 0
        %1865 = vmatpush1.bf16.msra.mxu0 %v1799
        %1866 = vmatprep.subr.bf16.mxu0 0
        %1867 = vmatpush1.bf16.msra.mxu0 %v1800
        %1868 = vmatprep.subr.bf16.mxu0 0
        %1869 = vmatpush1.bf16.msra.mxu0 %v1801
        %1870 = vmatprep.subr.bf16.mxu0 0
        %1871 = vmatpush1.bf16.msra.mxu0 %v1802
        %1872 = vmatprep.subr.bf16.mxu0 0
        %1873 = vmatpush1.bf16.msra.mxu0 %v1803
        %1874 = vmatprep.subr.bf16.mxu0 0
        %1875 = vmatpush1.bf16.msra.mxu0 %v1804
        %1876 = vmatprep.subr.bf16.mxu0 0
        %1877 = vmatpush1.bf16.msra.mxu0 %v1805
        %1878 = vmatprep.subr.bf16.mxu0 0
        %1879 = vmatpush1.bf16.msra.mxu0 %v1806
        %1880 = vmatprep.subr.bf16.mxu0 0
        %1881 = vmatpush1.bf16.msra.mxu0 %v1807
        %1882 = vmatprep.subr.bf16.mxu0 0
        %1883 = vmatpush1.bf16.msra.mxu0 %v1808
        %1884 = vmatprep.subr.bf16.mxu0 0
        %1885 = vmatpush1.bf16.msra.mxu0 %v1809
        %1886 = vmatprep.subr.bf16.mxu0 0
        %1887 = vmatpush1.bf16.msra.mxu0 %v1810
        %1888 = vmatprep.subr.bf16.mxu0 0
        %1889 = vmatpush1.bf16.msra.mxu0 %v1811
        %1890 = vmatprep.subr.bf16.mxu0 0
        %1891 = vmatpush1.bf16.msra.mxu0 %v1812
        %1892 = vmatprep.subr.bf16.mxu0 0
        %1893 = vmatpush1.bf16.msra.mxu0 %v1813
        %1894 = vmatprep.mubr.bf16.mxu0 %v1667
        %1895 = vmatmul.mubr.bf16.gmra.mrb[0].mxu0 %v1666
        %v1896 = vpop.f32.mrb[0].mxu0
        %v1897 = vadd.f32 0.0, %v1896
        %v1898 = vpop.f32.mrb[0].mxu0
        %v1899 = vpop.f32.mrb[0].mxu0
        %v1900 = vpop.f32.mrb[0].mxu0
        %1901 = vdwg.mxu0
        %1902 = vmatprep.subr.bf16.mxu0 0
        %1903 = vmatpush1.bf16.msra.mxu0 %v1814
        %1904 = vmatprep.subr.bf16.mxu0 0
        %1905 = vmatpush1.bf16.msra.mxu0 %v1815
        %1906 = vmatprep.subr.bf16.mxu0 0
        %1907 = vmatpush1.bf16.msra.mxu0 %v1816
        %1908 = vmatprep.subr.bf16.mxu0 0
        %1909 = vmatpush1.bf16.msra.mxu0 %v1817
        %1910 = vmatprep.subr.bf16.mxu0 0
        %1911 = vmatpush1.bf16.msra.mxu0 %v1818
        %1912 = vmatprep.subr.bf16.mxu0 0
        %1913 = vmatpush1.bf16.msra.mxu0 %v1819
        %1914 = vmatprep.subr.bf16.mxu0 0
        %1915 = vmatpush1.bf16.msra.mxu0 %v1820
        %1916 = vmatprep.subr.bf16.mxu0 0
        %1917 = vmatpush1.bf16.msra.mxu0 %v1821
        %1918 = vmatprep.subr.bf16.mxu0 0
        %1919 = vmatpush1.bf16.msra.mxu0 %v1822
        %1920 = vmatprep.subr.bf16.mxu0 0
        %1921 = vmatpush1.bf16.msra.mxu0 %v1823
        %1922 = vmatprep.subr.bf16.mxu0 0
        %1923 = vmatpush1.bf16.msra.mxu0 %v1824
        %1924 = vmatprep.subr.bf16.mxu0 0
        %1925 = vmatpush1.bf16.msra.mxu0 %v1825
        %1926 = vmatprep.subr.bf16.mxu0 0
        %1927 = vmatpush1.bf16.msra.mxu0 %v1826
        %1928 = vmatprep.subr.bf16.mxu0 0
        %1929 = vmatpush1.bf16.msra.mxu0 %v1827
        %1930 = vmatprep.subr.bf16.mxu0 0
        %1931 = vmatpush1.bf16.msra.mxu0 %v1828
        %1932 = vmatprep.subr.bf16.mxu0 0
        %1933 = vmatpush1.bf16.msra.mxu0 %v1829
        %1934 = vmatprep.mubr.bf16.mxu0 %v1669
        %1935 = vmatmul.mubr.bf16.gmra.mrb[0].mxu0 %v1668
        %v1936 = vpop.f32.mrb[0].mxu0
        %v1937 = vadd.f32 %v1897, %v1936
        %v1938 = vpop.f32.mrb[0].mxu0
        %v1939 = vpop.f32.mrb[0].mxu0
        %v1940 = vpop.f32.mrb[0].mxu0
        %1941 = vdwg.mxu0
        %1942 = vmatprep.subr.bf16.mxu0 0
        %1943 = vmatpush1.bf16.msra.mxu0 %v1798
        %1944 = vmatprep.subr.bf16.mxu0 0
        %1945 = vmatpush1.bf16.msra.mxu0 %v1799
        %1946 = vmatprep.subr.bf16.mxu0 0
        %1947 = vmatpush1.bf16.msra.mxu0 %v1800
        %1948 = vmatprep.subr.bf16.mxu0 0
        %1949 = vmatpush1.bf16.msra.mxu0 %v1801
        %1950 = vmatprep.subr.bf16.mxu0 0
        %1951 = vmatpush1.bf16.msra.mxu0 %v1802
        %1952 = vmatprep.subr.bf16.mxu0 0
        %1953 = vmatpush1.bf16.msra.mxu0 %v1803
        %1954 = vmatprep.subr.bf16.mxu0 0
        %1955 = vmatpush1.bf16.msra.mxu0 %v1804
        %1956 = vmatprep.subr.bf16.mxu0 0
        %1957 = vmatpush1.bf16.msra.mxu0 %v1805
        %1958 = vmatprep.subr.bf16.mxu0 0
        %1959 = vmatpush1.bf16.msra.mxu0 %v1806
        %1960 = vmatprep.subr.bf16.mxu0 0
        %1961 = vmatpush1.bf16.msra.mxu0 %v1807
        %1962 = vmatprep.subr.bf16.mxu0 0
        %1963 = vmatpush1.bf16.msra.mxu0 %v1808
        %1964 = vmatprep.subr.bf16.mxu0 0
        %1965 = vmatpush1.bf16.msra.mxu0 %v1809
        %1966 = vmatprep.subr.bf16.mxu0 0
        %1967 = vmatpush1.bf16.msra.mxu0 %v1810
        %1968 = vmatprep.subr.bf16.mxu0 0
        %1969 = vmatpush1.bf16.msra.mxu0 %v1811
        %1970 = vmatprep.subr.bf16.mxu0 0
        %1971 = vmatpush1.bf16.msra.mxu0 %v1812
        %1972 = vmatprep.subr.bf16.mxu0 0
        %1973 = vmatpush1.bf16.msra.mxu0 %v1813
        %1974 = vmatprep.mubr.bf16.mxu0 %v1655
        %1975 = vmatmul.mubr.bf16.gmra.mrb[0].mxu0 %v1654
        %v1976 = vpop.f32.mrb[0].mxu0
        %v1977 = vadd.f32 %v1937, %v1976
        %v1978 = vpop.f32.mrb[0].mxu0
        %v1979 = vpop.f32.mrb[0].mxu0
        %v1980 = vpop.f32.mrb[0].mxu0
        %1981 = vdwg.mxu0
        %1982 = vmatprep.subr.bf16.mxu0 0
        %1983 = vmatpush1.bf16.msra.mxu0 %v1814
        %1984 = vmatprep.subr.bf16.mxu0 0
        %1985 = vmatpush1.bf16.msra.mxu0 %v1815
        %1986 = vmatprep.subr.bf16.mxu0 0
        %1987 = vmatpush1.bf16.msra.mxu0 %v1816
        %1988 = vmatprep.subr.bf16.mxu0 0
        %1989 = vmatpush1.bf16.msra.mxu0 %v1817
        %1990 = vmatprep.subr.bf16.mxu0 0
        %1991 = vmatpush1.bf16.msra.mxu0 %v1818
        %1992 = vmatprep.subr.bf16.mxu0 0
        %1993 = vmatpush1.bf16.msra.mxu0 %v1819
        %1994 = vmatprep.subr.bf16.mxu0 0
        %1995 = vmatpush1.bf16.msra.mxu0 %v1820
        %1996 = vmatprep.subr.bf16.mxu0 0
        %1997 = vmatpush1.bf16.msra.mxu0 %v1821
        %1998 = vmatprep.subr.bf16.mxu0 0
        %1999 = vmatpush1.bf16.msra.mxu0 %v1822
        %2000 = vmatprep.subr.bf16.mxu0 0
        %2001 = vmatpush1.bf16.msra.mxu0 %v1823
        %2002 = vmatprep.subr.bf16.mxu0 0
        %2003 = vmatpush1.bf16.msra.mxu0 %v1824
        %2004 = vmatprep.subr.bf16.mxu0 0
        %2005 = vmatpush1.bf16.msra.mxu0 %v1825
        %2006 = vmatprep.subr.bf16.mxu0 0
        %2007 = vmatpush1.bf16.msra.mxu0 %v1826
        %2008 = vmatprep.subr.bf16.mxu0 0
        %2009 = vmatpush1.bf16.msra.mxu0 %v1827
        %2010 = vmatprep.subr.bf16.mxu0 0
        %2011 = vmatpush1.bf16.msra.mxu0 %v1828
        %2012 = vmatprep.subr.bf16.mxu0 0
        %2013 = vmatpush1.bf16.msra.mxu0 %v1829
        %2014 = vmatprep.mubr.bf16.mxu0 %v1657
        %2015 = vmatmul.mubr.bf16.gmra.mrb[0].mxu0 %v1656
        %v2016 = vpop.f32.mrb[0].mxu0
        %v2017 = vadd.f32 %v1977, %v2016
        %v2018 = vpop.f32.mrb[0].mxu0
        %v2019 = vpop.f32.mrb[0].mxu0
        %v2020 = vpop.f32.mrb[0].mxu0
        %2021 = vdwg.mxu0
        %v2086 = vunpack.c.l.b16 %v1590
        %v2087 = vunpack.c.l.b16 %v1591
        %v2088 = vunpack.c.l.b16 %v1592
        %v2089 = vunpack.c.l.b16 %v1593
        %v2090 = vunpack.c.l.b16 %v1594
        %v2091 = vunpack.c.l.b16 %v1595
        %v2092 = vunpack.c.l.b16 %v1596
        %v2093 = vunpack.c.l.b16 %v1597
        %v2094 = vunpack.c.l.b16 %v1598
        %v2095 = vunpack.c.l.b16 %v1599
        %v2096 = vunpack.c.l.b16 %v1600
        %v2097 = vunpack.c.l.b16 %v1601
        %v2098 = vunpack.c.l.b16 %v1602
        %v2099 = vunpack.c.l.b16 %v1603
        %v2100 = vunpack.c.l.b16 %v1604
        %v2101 = vunpack.c.l.b16 %v1605
        %v2102 = vunpack.c.l.b16 %v1606
        %v2103 = vunpack.c.l.b16 %v1607
        %v2104 = vunpack.c.l.b16 %v1608
        %v2105 = vunpack.c.l.b16 %v1609
        %v2106 = vunpack.c.l.b16 %v1610
        %v2107 = vunpack.c.l.b16 %v1611
        %v2108 = vunpack.c.l.b16 %v1612
        %v2109 = vunpack.c.l.b16 %v1613
        %v2110 = vunpack.c.l.b16 %v1614
        %v2111 = vunpack.c.l.b16 %v1615
        %v2112 = vunpack.c.l.b16 %v1616
        %v2113 = vunpack.c.l.b16 %v1617
        %v2114 = vunpack.c.l.b16 %v1618
        %v2115 = vunpack.c.l.b16 %v1619
        %v2116 = vunpack.c.l.b16 %v1620
        %v2117 = vunpack.c.l.b16 %v1621
        %v2118 = vunpack.c.l.b16 %v1622
        %v2119 = vunpack.c.l.b16 %v1623
        %v2120 = vunpack.c.l.b16 %v1624
        %v2121 = vunpack.c.l.b16 %v1625
        %v2122 = vunpack.c.l.b16 %v1626
        %v2123 = vunpack.c.l.b16 %v1627
        %v2124 = vunpack.c.l.b16 %v1628
        %v2125 = vunpack.c.l.b16 %v1629
        %v2126 = vunpack.c.l.b16 %v1630
        %v2127 = vunpack.c.l.b16 %v1631
        %v2128 = vunpack.c.l.b16 %v1632
        %v2129 = vunpack.c.l.b16 %v1633
        %v2130 = vunpack.c.l.b16 %v1634
        %v2131 = vunpack.c.l.b16 %v1635
        %v2132 = vunpack.c.l.b16 %v1636
        %v2133 = vunpack.c.l.b16 %v1637
        %v2134 = vunpack.c.l.b16 %v1638
        %v2135 = vunpack.c.l.b16 %v1639
        %v2136 = vunpack.c.l.b16 %v1640
        %v2137 = vunpack.c.l.b16 %v1641
        %v2138 = vunpack.c.l.b16 %v1642
        %v2139 = vunpack.c.l.b16 %v1643
        %v2140 = vunpack.c.l.b16 %v1644
        %v2141 = vunpack.c.l.b16 %v1645
        %v2142 = vunpack.c.l.b16 %v1646
        %v2143 = vunpack.c.l.b16 %v1647
        %v2144 = vunpack.c.l.b16 %v1648
        %v2145 = vunpack.c.l.b16 %v1649
        %v2146 = vunpack.c.l.b16 %v1650
        %v2147 = vunpack.c.l.b16 %v1651
        %v2148 = vunpack.c.l.b16 %v1652
        %v2149 = vunpack.c.l.b16 %v1653
        %v2150 = vpack.c.b16 %v2087, %v2086
        %v2151 = vpack.c.b16 %v2089, %v2088
        %v2152 = vpack.c.b16 %v2091, %v2090
        %v2153 = vpack.c.b16 %v2093, %v2092
        %v2154 = vpack.c.b16 %v2095, %v2094
        %v2155 = vpack.c.b16 %v2097, %v2096
        %v2156 = vpack.c.b16 %v2099, %v2098
        %v2157 = vpack.c.b16 %v2101, %v2100
        %v2158 = vpack.c.b16 %v2103, %v2102
        %v2159 = vpack.c.b16 %v2105, %v2104
        %v2160 = vpack.c.b16 %v2107, %v2106
        %v2161 = vpack.c.b16 %v2109, %v2108
        %v2162 = vpack.c.b16 %v2111, %v2110
        %v2163 = vpack.c.b16 %v2113, %v2112
        %v2164 = vpack.c.b16 %v2115, %v2114
        %v2165 = vpack.c.b16 %v2117, %v2116
        %v2166 = vpack.c.b16 %v2119, %v2118
        %v2167 = vpack.c.b16 %v2121, %v2120
        %v2168 = vpack.c.b16 %v2123, %v2122
        %v2169 = vpack.c.b16 %v2125, %v2124
        %v2170 = vpack.c.b16 %v2127, %v2126
        %v2171 = vpack.c.b16 %v2129, %v2128
        %v2172 = vpack.c.b16 %v2131, %v2130
        %v2173 = vpack.c.b16 %v2133, %v2132
        %v2174 = vpack.c.b16 %v2135, %v2134
        %v2175 = vpack.c.b16 %v2137, %v2136
        %v2176 = vpack.c.b16 %v2139, %v2138
        %v2177 = vpack.c.b16 %v2141, %v2140
        %v2178 = vpack.c.b16 %v2143, %v2142
        %v2179 = vpack.c.b16 %v2145, %v2144
        %v2180 = vpack.c.b16 %v2147, %v2146
        %v2181 = vpack.c.b16 %v2149, %v2148
        %2214 = vmatprep.subr.bf16.mxu0 0
        %2215 = vmatpush1.bf16.msra.mxu0 %v2150
        %2216 = vmatprep.subr.bf16.mxu0 0
        %2217 = vmatpush1.bf16.msra.mxu0 %v2151
        %2218 = vmatprep.subr.bf16.mxu0 0
        %2219 = vmatpush1.bf16.msra.mxu0 %v2152
        %2220 = vmatprep.subr.bf16.mxu0 0
        %2221 = vmatpush1.bf16.msra.mxu0 %v2153
        %2222 = vmatprep.subr.bf16.mxu0 0
        %2223 = vmatpush1.bf16.msra.mxu0 %v2154
        %2224 = vmatprep.subr.bf16.mxu0 0
        %2225 = vmatpush1.bf16.msra.mxu0 %v2155
        %2226 = vmatprep.subr.bf16.mxu0 0
        %2227 = vmatpush1.bf16.msra.mxu0 %v2156
        %2228 = vmatprep.subr.bf16.mxu0 0
        %2229 = vmatpush1.bf16.msra.mxu0 %v2157
        %2230 = vmatprep.subr.bf16.mxu0 0
        %2231 = vmatpush1.bf16.msra.mxu0 %v2158
        %2232 = vmatprep.subr.bf16.mxu0 0
        %2233 = vmatpush1.bf16.msra.mxu0 %v2159
        %2234 = vmatprep.subr.bf16.mxu0 0
        %2235 = vmatpush1.bf16.msra.mxu0 %v2160
        %2236 = vmatprep.subr.bf16.mxu0 0
        %2237 = vmatpush1.bf16.msra.mxu0 %v2161
        %2238 = vmatprep.subr.bf16.mxu0 0
        %2239 = vmatpush1.bf16.msra.mxu0 %v2162
        %2240 = vmatprep.subr.bf16.mxu0 0
        %2241 = vmatpush1.bf16.msra.mxu0 %v2163
        %2242 = vmatprep.subr.bf16.mxu0 0
        %2243 = vmatpush1.bf16.msra.mxu0 %v2164
        %2244 = vmatprep.subr.bf16.mxu0 0
        %2245 = vmatpush1.bf16.msra.mxu0 %v2165
        %2246 = vmatprep.mubr.bf16.mxu0 %v1655
        %2247 = vmatmul.mubr.bf16.gmra.mrb[0].mxu0 %v1654
        %v2248 = vpop.f32.mrb[0].mxu0
        %v2249 = vadd.f32 0.0, %v2248
        %v2250 = vpop.f32.mrb[0].mxu0
        %v2251 = vpop.f32.mrb[0].mxu0
        %v2252 = vpop.f32.mrb[0].mxu0
        %2253 = vdwg.mxu0
        %2254 = vmatprep.subr.bf16.mxu0 0
        %2255 = vmatpush1.bf16.msra.mxu0 %v2166
        %2256 = vmatprep.subr.bf16.mxu0 0
        %2257 = vmatpush1.bf16.msra.mxu0 %v2167
        %2258 = vmatprep.subr.bf16.mxu0 0
        %2259 = vmatpush1.bf16.msra.mxu0 %v2168
        %2260 = vmatprep.subr.bf16.mxu0 0
        %2261 = vmatpush1.bf16.msra.mxu0 %v2169
        %2262 = vmatprep.subr.bf16.mxu0 0
        %2263 = vmatpush1.bf16.msra.mxu0 %v2170
        %2264 = vmatprep.subr.bf16.mxu0 0
        %2265 = vmatpush1.bf16.msra.mxu0 %v2171
        %2266 = vmatprep.subr.bf16.mxu0 0
        %2267 = vmatpush1.bf16.msra.mxu0 %v2172
        %2268 = vmatprep.subr.bf16.mxu0 0
        %2269 = vmatpush1.bf16.msra.mxu0 %v2173
        %2270 = vmatprep.subr.bf16.mxu0 0
        %2271 = vmatpush1.bf16.msra.mxu0 %v2174
        %2272 = vmatprep.subr.bf16.mxu0 0
        %2273 = vmatpush1.bf16.msra.mxu0 %v2175
        %2274 = vmatprep.subr.bf16.mxu0 0
        %2275 = vmatpush1.bf16.msra.mxu0 %v2176
        %2276 = vmatprep.subr.bf16.mxu0 0
        %2277 = vmatpush1.bf16.msra.mxu0 %v2177
        %2278 = vmatprep.subr.bf16.mxu0 0
        %2279 = vmatpush1.bf16.msra.mxu0 %v2178
        %2280 = vmatprep.subr.bf16.mxu0 0
        %2281 = vmatpush1.bf16.msra.mxu0 %v2179
        %2282 = vmatprep.subr.bf16.mxu0 0
        %2283 = vmatpush1.bf16.msra.mxu0 %v2180
        %2284 = vmatprep.subr.bf16.mxu0 0
        %2285 = vmatpush1.bf16.msra.mxu0 %v2181
        %2286 = vmatprep.mubr.bf16.mxu0 %v1657
        %2287 = vmatmul.mubr.bf16.gmra.mrb[0].mxu0 %v1656
        %v2288 = vpop.f32.mrb[0].mxu0
        %v2289 = vadd.f32 %v2249, %v2288
        %v2290 = vpop.f32.mrb[0].mxu0
        %v2291 = vpop.f32.mrb[0].mxu0
        %v2292 = vpop.f32.mrb[0].mxu0
        %2293 = vdwg.mxu0
        %v2294 = vadd.f32 %v2017, %v2289
        %v2295 = vld [vmem:[%s6] sm:$0x1]
        %v2297 = vlaneseq
        %v2298 = vshrl.u32 %v2297, 7
        %v2299 = vsub.s32 0, %v2298
        %v2300 = vrot.slane %v2295, %v2299
        %v2302 = vadd.f32 %v2294, %v2300
        %2303 = vst [vmem:[%s389] sm:$0xff] %v2302
        %s2304 = sand.u32 %s191, 1
        %s2305 = scalar_lea.sflag [#allocation4], %s2304
        %s2306 = sand.u32 %s191, 1
        %s2307 = smul.addr %s2306, 32
        %s2308 = scalar_lea.vmem [#allocation11], %s2307
        %s2309 = sand.u32 %s217, 1
        %s2310 = scalar_lea.sflag [#allocation13], %s2309
        %s2311 = sand.u32 %s217, 1
        %s2312 = smul.addr %s2311, 8
        %s2313 = scalar_lea.vmem [#allocation12], %s2312
        // Predicated region
        $region69: #{tpu_custom_call.1} parent=47 // pred_check
          %p2314 = pneg %p201
        $region70: #{tpu_custom_call.1} parent=47 // pred_check_branch
          %2316 = sbr.rel (%p2314) target = $region72
        $region71: #{tpu_custom_call.1} parent=47 // pred_region
          %s2318 = ssub.s32 512, 512
          %2319 = vsyncadd %s2305, %s2318
          %s2320 = smul.addr %s31, 4
          %s2321 = smul.addr %s2320, 128
          %s2322 = scalar_lea.hbm %s7, %s2321
          %s2324 = sshll.u32 %s2308, 4
          %s2325 = int_to_ptr.vmem [resolvable:$true] %s2324
          %2327 = dma.vmem_to_hbm [thread:$0]  %s2325, 512, %s2322, %s2305
        $region72: #{tpu_custom_call.1} parent=47 // pred_fallthru
          _
        // Predicated region
        $region73: #{tpu_custom_call.1} parent=47 // pred_check
          %p2328 = pneg %p227
        $region74: #{tpu_custom_call.1} parent=47 // pred_check_branch
          %2330 = sbr.rel (%p2328) target = $region76
        $region75: #{tpu_custom_call.1} parent=47 // pred_region
          %s2332 = ssub.s32 128, 128
          %2333 = vsyncadd %s2310, %s2332
          %s2334 = smul.addr %s31, 128
          %s2335 = scalar_lea.hbm %s8, %s2334
          %s2337 = sshll.u32 %s2313, 4
          %s2338 = int_to_ptr.vmem [resolvable:$true] %s2337
          %2340 = dma.vmem_to_hbm [thread:$0]  %s2338, 128, %s2335, %s2310
        $region76: #{tpu_custom_call.1} parent=47 // pred_fallthru
          _
      $region48: #{tpu_custom_call.1} parent=5 // pred_fallthru
        _
      %p2341 = scmp.le.s32.totalorder 2, %s26
      // Predicated region
      $region77: #{tpu_custom_call.1} parent=5 // pred_check
        %p2342 = pneg %p2341
      $region78: #{tpu_custom_call.1} parent=5 // pred_check_branch
        %2344 = sbr.rel (%p2342) target = $region80
      $region79: #{tpu_custom_call.1} parent=5 // pred_region
        %s2345 = ssub.s32 %s26, 2
        // Predicated region
        $region81: #{tpu_custom_call.1} parent=79 // pred_check
          %p2346 = pneg %p207
        $region82: #{tpu_custom_call.1} parent=79 // pred_check_branch
          %2348 = sbr.rel (%p2346) target = $region84
        $region83: #{tpu_custom_call.1} parent=79 // pred_region
          %s2349 = sand.u32 %s192, 1
          %s2350 = scalar_lea.sflag [#allocation4], %s2349
          %s2351 = sand.u32 %s192, 1
          %s2352 = smul.addr %s2351, 32
          %s2353 = scalar_lea.vmem [#allocation11], %s2352
          %2354 = dma.done %s2350, 512
        $region84: #{tpu_custom_call.1} parent=79 // pred_fallthru
          _
        // Predicated region
        $region85: #{tpu_custom_call.1} parent=79 // pred_check
          %p2355 = pneg %p233
        $region86: #{tpu_custom_call.1} parent=79 // pred_check_branch
          %2357 = sbr.rel (%p2355) target = $region88
        $region87: #{tpu_custom_call.1} parent=79 // pred_region
          %s2358 = sand.u32 %s218, 1
          %s2359 = scalar_lea.sflag [#allocation13], %s2358
          %s2360 = sand.u32 %s218, 1
          %s2361 = smul.addr %s2360, 8
          %s2362 = scalar_lea.vmem [#allocation12], %s2361
          %2363 = dma.done %s2359, 128
        $region88: #{tpu_custom_call.1} parent=79 // pred_fallthru
          _
      $region80: #{tpu_custom_call.1} parent=5 // pred_fallthru
        _
    $region6: #{tpu_custom_call.1} parent=1 // loop_footer
      %s30 = sadd.s32 1, %s26
    $region7: #{tpu_custom_call.1} parent=1 // loop_footer_branch
      %25 = sbr.rel target = $region3
    $region8: #{tpu_custom_call.1} parent=1 // loop_exit
      _
    %2364 = vsyncpa [#allocation3], 1
    %s2365 = scalar_lea.sflag [#allocation3], 1
    %2366 = vsyncpa %s2365, 1
    %2367 = vsyncpa [#allocation6], 1
    %2368 = vsyncpa [#allocation9], 1
    %2369 = vsyncpa [#allocation4], 1
    %s2370 = scalar_lea.sflag [#allocation4], 1
    %2371 = vsyncpa %s2370, 1
    %2372 = vsyncpa [#allocation13], 1
    %s2373 = scalar_lea.sflag [#allocation13], 1
    %2374 = vsyncpa %s2373, 1

</llo_original>
